<compile_context>
chip_gen: v6e
topology: v6e:2x2x1
jax: 0.10.0
libtpu: 0.0.40
codegen_flags: <defaults>
</compile_context>

<pallas_src>
import math
import jax
import jax.numpy as jnp
from jax import lax
from jax.experimental import pallas as pl
from jax.experimental.pallas import tpu as pltpu

# ---- small synthetic hyper-parameters consistent with the module ----
BATCH = 2
DIM = 32                  # `dimension`
DIM_FF = 64               # `dim_feedforward`
NUM_QR_INTERVALS = 4      # len(self.layers_list)
NUM_LAYERS = 2            # => Linear(D,F)+ReLU+Dropout then Linear(F,1)
MAX_NUM_ACTION_CANDIDATES = 8
NUM_TYPES_OF_ACTIONS = 6  # candidates >= this value are padding -> masked to -inf

NUM_SPARSE = 8
NUM_NUMERIC = 2
NUM_PROGRESSION = 6
ENCODER_WIDTH = NUM_SPARSE + NUM_NUMERIC + NUM_PROGRESSION + MAX_NUM_ACTION_CANDIDATES  # 24

SPARSE_VOCAB = 20
PROGRESSION_VOCAB = 16
CANDIDATE_VOCAB = NUM_TYPES_OF_ACTIONS + 2

# combined embedding-table layout (rows)
PROG_OFFSET = SPARSE_VOCAB                          # 20
CAND_OFFSET = PROG_OFFSET + PROGRESSION_VOCAB       # 36
NUMW_OFFSET = CAND_OFFSET + CANDIDATE_VOCAB         # 44
NUMB_OFFSET = NUMW_OFFSET + NUM_NUMERIC             # 46
TABLE_ROWS = NUMB_OFFSET + NUM_NUMERIC              # 48

NUM_HEADS = 1 + NUM_QR_INTERVALS                    # value head + QR heads = 5
BW = BATCH * ENCODER_WIDTH                          # 48
BM = BATCH * MAX_NUM_ACTION_CANDIDATES              # 16


def _vmem():
    # whole-array block resident in VMEM (all operands here are tiny)
    return pl.BlockSpec(memory_space=pltpu.MemorySpace.VMEM)


def _layer_norm(x, gamma, beta, eps=1e-5):
    mu = jnp.mean(x, axis=-1, keepdims=True)
    var = jnp.mean((x - mu) ** 2, axis=-1, keepdims=True)
    return (x - mu) * lax.rsqrt(var + eps) * gamma + beta


# =====================  single fused kernel  =====================
# TODO(synk): kanachan's Encoder source (embedding tables + nn.TransformerEncoder
# stack) was not provided; implemented a single-head, single-layer post-LN
# TransformerEncoder-style block (no key-padding mask) over the embeddings.
def theta_kernel(tok_ref, val_ref, table_ref, w_attn_ref, w_ffn1_ref, w_ffn2_ref,
                 vec_ref, w_dec1_ref, w_dec2_ref, b_dec_ref, theta_ref):
    f32 = jnp.float32
    D, F, W, M = DIM, DIM_FF, ENCODER_WIDTH, MAX_NUM_ACTION_CANDIDATES

    # ---------- embeddings: one scatter-matrix matmul ----------
    # sel[row, :] selects (index, scale) pairs; table holds sparse/prog/cand
    # embeddings plus the numeric affine rows (w, b).  emb = sel @ table.
    idx = tok_ref[...]                                           # (BW, 2) int32
    vals = val_ref[...]                                          # (BW, 2) f32
    iota = lax.broadcasted_iota(jnp.int32, (BW, TABLE_ROWS), 1)
    sel = ((iota == idx[:, 0:1]).astype(f32) * vals[:, 0:1]
           + (iota == idx[:, 1:2]).astype(f32) * vals[:, 1:2])   # (BW, 48)
    x = jnp.dot(sel, table_ref[...], preferred_element_type=f32)  # (BW, D)

    # ---------- encoder block (single-head, post-LN), batched via flat matmuls ----------
    w_attn = w_attn_ref[...]                                     # (D, 4D) = [Wq|Wk|Wv|Wo]
    qkv = (jnp.dot(x, w_attn[:, 0:3 * D], preferred_element_type=f32)
           + vec_ref[0:1, 0:3 * D])                              # (BW, 3D)
    q = qkv[:, 0:D].reshape(BATCH, W, D)
    k = qkv[:, D:2 * D].reshape(BATCH, W, D)
    v = qkv[:, 2 * D:3 * D].reshape(BATCH, W, D)

    s = jnp.einsum('bqd,bkd->bqk', q, k,
                   preferred_element_type=f32) * (1.0 / math.sqrt(D))
    s = s - jnp.max(s, axis=-1, keepdims=True)
    p = jnp.exp(s)
    p = p * pl.reciprocal(jnp.sum(p, axis=-1, keepdims=True), approx=True)
    attn = jnp.einsum('bqk,bkd->bqd', p, v, preferred_element_type=f32)  # (B, W, D)
    attn = attn.reshape(BW, D)
    attn = (jnp.dot(attn, w_attn[:, 3 * D:4 * D], preferred_element_type=f32)
            + vec_ref[1:2, 0:D])

    x1 = _layer_norm(x + attn, vec_ref[2:3, 0:D], vec_ref[3:4, 0:D])
    h = jnp.maximum(
        jnp.dot(x1, w_ffn1_ref[...], preferred_element_type=f32) + vec_ref[4:5, 0:F], 0.0)
    y = jnp.dot(h, w_ffn2_ref[...], preferred_element_type=f32) + vec_ref[5:6, 0:D]
    enc = _layer_norm(x1 + y, vec_ref[6:7, 0:D], vec_ref[7:8, 0:D])      # (BW, D)

    # ---------- ThetaDecoder (value head + NUM_QR_INTERVALS advantage heads) ----------
    # tail = encode[:, -M:] ; valid mask derived in-kernel from the candidate token
    # indices (table index < CAND_OFFSET + NUM_TYPES_OF_ACTIONS  <=>  candidate < 6).
    tail = enc.reshape(BATCH, W, D)[:, W - M:, :].reshape(BM, D)         # (BM, D)
    cand_idx = idx[:, 0:1].reshape(BATCH, W, 1)[:, W - M:, :]            # (B, M, 1)
    valid = (cand_idx < CAND_OFFSET + NUM_TYPES_OF_ACTIONS).astype(f32)  # (B, M, 1)

    # fused first layers of all 5 heads: (BM, D) @ (D, 5F)
    h_all = jnp.maximum(
        jnp.dot(tail, w_dec1_ref[...], preferred_element_type=f32) + b_dec_ref[0:1, :], 0.0)
    # all 5 second layers as ONE packed block-diagonal matmul: (BM, 5F) @ (5F, 5)
    heads = (jnp.dot(h_all, w_dec2_ref[...], preferred_element_type=f32)
             + b_dec_ref[1:2, 0:NUM_HEADS])                              # (BM, 5)

    # value head: masked mean over valid candidates -> V(s) per batch
    # TODO(synk): ValueDecoder source not provided; masked-mean pooling over valid
    # candidates is the assumed reduction to the per-batch scalar value.
    v_pc = heads[:, 0:1].reshape(BATCH, M, 1)                            # (B, M, 1)
    num = jnp.sum(v_pc * valid, axis=1, keepdims=True)                   # (B, 1, 1)
    den = jnp.maximum(jnp.sum(valid, axis=1, keepdims=True), 1.0)        # (B, 1, 1)
    value = num * pl.reciprocal(den, approx=True)                        # (B, 1, 1)

    # q = V(s) + A_i(s, a); padded candidates masked to -inf.  Single dense store
    # of theta in its final (B, M, NUM_QR_INTERVALS) layout.
    adv = heads[:, 1:NUM_HEADS].reshape(BATCH, M, NUM_QR_INTERVALS)      # (B, M, I)
    q_sa = value + adv
    theta_ref[...] = jnp.where(valid > 0.5, q_sa, -jnp.inf)


# =====================  parameters & packing  =====================
def init_params(key):
    ks = iter(jax.random.split(key, 32))

    def nrm(shape, scale=0.05):
        return (scale * jax.random.normal(next(ks), shape)).astype(jnp.float32)

    return {
        # embedding glue
        'sparse_emb': nrm((SPARSE_VOCAB, DIM)),
        'numeric_w': nrm((NUM_NUMERIC, DIM)),
        'numeric_b': nrm((NUM_NUMERIC, DIM)),
        'prog_emb': nrm((PROGRESSION_VOCAB, DIM)),
        'cand_emb': nrm((CANDIDATE_VOCAB, DIM)),
        # encoder block
        'wq': nrm((DIM, DIM)), 'bq': nrm((1, DIM)),
        'wk': nrm((DIM, DIM)), 'bk': nrm((1, DIM)),
        'wv': nrm((DIM, DIM)), 'bv': nrm((1, DIM)),
        'wo': nrm((DIM, DIM)), 'bo': nrm((1, DIM)),
        'g1': jnp.ones((1, DIM), jnp.float32), 'be1': jnp.zeros((1, DIM), jnp.float32),
        'w1': nrm((DIM, DIM_FF)), 'b1': nrm((1, DIM_FF)),
        'w2': nrm((DIM_FF, DIM)), 'b2': nrm((1, DIM)),
        'g2': jnp.ones((1, DIM), jnp.float32), 'be2': jnp.zeros((1, DIM), jnp.float32),
        # ValueDecoder (num_layers=2)
        'v_w0': nrm((DIM, DIM_FF)), 'v_b0': nrm((1, DIM_FF)),
        'v_w1': nrm((DIM_FF, 1)), 'v_b1': nrm((1, 1)),
        # ThetaDecoder advantage heads, stacked over NUM_QR_INTERVALS
        'a_w0': nrm((NUM_QR_INTERVALS, DIM, DIM_FF)),
        'a_b0': nrm((NUM_QR_INTERVALS, 1, DIM_FF)),
        'a_w1': nrm((NUM_QR_INTERVALS, DIM_FF, 1)),
        'a_b1': nrm((NUM_QR_INTERVALS, 1, 1)),
    }


def pack_params(p):
    """One-time host-side packing of the many tiny parameter arrays into slabs."""
    D, F = DIM, DIM_FF
    # combined embedding table: [sparse | progression | candidate | numeric_w | numeric_b]
    table = jnp.concatenate([p['sparse_emb'], p['prog_emb'], p['cand_emb'],
                             p['numeric_w'], p['numeric_b']], axis=0)        # (48, D)
    # fused attention weights [Wq|Wk|Wv|Wo]
    w_attn = jnp.concatenate([p['wq'], p['wk'], p['wv'], p['wo']], axis=1)   # (D, 4D)
    # all encoder bias / LN vectors packed into one (8, 128) slab (one vreg tile)
    vec = jnp.zeros((8, 4 * D), jnp.float32)
    vec = vec.at[0, 0:3 * D].set(jnp.concatenate([p['bq'], p['bk'], p['bv']], axis=1)[0])
    vec = vec.at[1, 0:D].set(p['bo'][0])
    vec = vec.at[2, 0:D].set(p['g1'][0])
    vec = vec.at[3, 0:D].set(p['be1'][0])
    vec = vec.at[4, 0:F].set(p['b1'][0])
    vec = vec.at[5, 0:D].set(p['b2'][0])
    vec = vec.at[6, 0:D].set(p['g2'][0])
    vec = vec.at[7, 0:D].set(p['be2'][0])
    # decoder: fused first layers [value | adv_0 .. adv_3] -> (D, 5F)
    w_dec1 = jnp.concatenate([p['v_w0']] + [p['a_w0'][i] for i in range(NUM_QR_INTERVALS)],
                             axis=1)
    b_dec1 = jnp.concatenate([p['v_b0']] + [p['a_b0'][i] for i in range(NUM_QR_INTERVALS)],
                             axis=1)                                          # (1, 5F)
    # packed block-diagonal second layers -> (5F, 5); column h uses rows h*F:(h+1)*F
    w2_cols = [p['v_w1']] + [p['a_w1'][i] for i in range(NUM_QR_INTERVALS)]
    w_dec2 = jnp.zeros((NUM_HEADS * F, NUM_HEADS), jnp.float32)
    for h, w in enumerate(w2_cols):
        w_dec2 = w_dec2.at[h * F:(h + 1) * F, h:h + 1].set(w)
    b_dec2 = jnp.concatenate([p['v_b1']] + [p['a_b1'][i] for i in range(NUM_QR_INTERVALS)],
                             axis=1)                                          # (1, 5)
    b_dec = jnp.zeros((2, NUM_HEADS * F), jnp.float32)
    b_dec = b_dec.at[0, :].set(b_dec1[0])
    b_dec = b_dec.at[1, 0:NUM_HEADS].set(b_dec2[0])
    return {'table': table, 'w_attn': w_attn, 'w_ffn1': p['w1'], 'w_ffn2': p['w2'],
            'vec': vec, 'w_dec1': w_dec1, 'w_dec2': w_dec2, 'b_dec': b_dec}


def pack_tokens(sparse, numeric, progression, candidates):
    """Tiny (B*W, 2) index / scale arrays driving the in-kernel embedding matmul."""
    B = sparse.shape[0]
    num_iota = jnp.broadcast_to(jnp.arange(NUM_NUMERIC, dtype=jnp.int32), (B, NUM_NUMERIC))
    idx_a = jnp.concatenate([sparse.astype(jnp.int32),
                             NUMW_OFFSET + num_iota,
                             PROG_OFFSET + progression.astype(jnp.int32),
                             CAND_OFFSET + candidates.astype(jnp.int32)], axis=1)
    idx_b = jnp.concatenate([jnp.zeros((B, NUM_SPARSE), jnp.int32),
                             NUMB_OFFSET + num_iota,
                             jnp.zeros((B, NUM_PROGRESSION), jnp.int32),
                             jnp.zeros((B, MAX_NUM_ACTION_CANDIDATES), jnp.int32)], axis=1)
    val_a = jnp.concatenate([jnp.ones((B, NUM_SPARSE), jnp.float32),
                             numeric.astype(jnp.float32),
                             jnp.ones((B, NUM_PROGRESSION), jnp.float32),
                             jnp.ones((B, MAX_NUM_ACTION_CANDIDATES), jnp.float32)], axis=1)
    val_b = jnp.concatenate([jnp.zeros((B, NUM_SPARSE), jnp.float32),
                             jnp.ones((B, NUM_NUMERIC), jnp.float32),
                             jnp.zeros((B, NUM_PROGRESSION), jnp.float32),
                             jnp.zeros((B, MAX_NUM_ACTION_CANDIDATES), jnp.float32)], axis=1)
    tok_idx = jnp.stack([idx_a, idx_b], axis=-1).reshape(B * ENCODER_WIDTH, 2)
    tok_val = jnp.stack([val_a, val_b], axis=-1).reshape(B * ENCODER_WIDTH, 2)
    return tok_idx, tok_val


def theta_model_forward(packed, sparse, numeric, progression, candidates):
    tok_idx, tok_val = pack_tokens(sparse, numeric, progression, candidates)
    # nn.Dropout is identity at inference time (not applied).
    # TODO(synk): for large batches, add a grid over the batch axis with
    # dimension_semantics=("parallel",) to use both v7x TensorCores; at B=2 the
    # grid-free whole-array kernel avoids per-step overhead.
    return pl.pallas_call(
        theta_kernel,
        out_shape=jax.ShapeDtypeStruct(
            (BATCH, MAX_NUM_ACTION_CANDIDATES, NUM_QR_INTERVALS), jnp.float32),
        in_specs=[_vmem()] * 10,
        out_specs=_vmem(),
    )(tok_idx, tok_val, packed['table'], packed['w_attn'], packed['w_ffn1'],
      packed['w_ffn2'], packed['vec'], packed['w_dec1'], packed['w_dec2'],
      packed['b_dec'])


if __name__ == "__main__":
    key = jax.random.PRNGKey(0)
    kp, k1, k2, k3, k4 = jax.random.split(key, 5)

    params = init_params(kp)
    packed = pack_params(params)

    sparse = jax.random.randint(k1, (BATCH, NUM_SPARSE), 0, SPARSE_VOCAB, dtype=jnp.int32)
    numeric = jax.random.normal(k2, (BATCH, NUM_NUMERIC), dtype=jnp.float32)
    progression = jax.random.randint(k3, (BATCH, NUM_PROGRESSION), 0, PROGRESSION_VOCAB,
                                     dtype=jnp.int32)
    candidates = jax.random.randint(k4, (BATCH, MAX_NUM_ACTION_CANDIDATES), 0,
                                    CANDIDATE_VOCAB, dtype=jnp.int32)

    fwd = jax.jit(theta_model_forward)
    theta = fwd(packed, sparse, numeric, progression, candidates)
    jax.block_until_ready(theta)
    assert theta.shape == (BATCH, MAX_NUM_ACTION_CANDIDATES, NUM_QR_INTERVALS)
    print("KERNEL_OK")
</pallas_src>

<mosaic_0001>
module attributes {stable_mosaic.version = 11 : i64} {
  func.func @theta_kernel(%arg0: memref<48x2xi32, #tpu.memory_space<vmem>>, %arg1: memref<48x2xf32, #tpu.memory_space<vmem>>, %arg2: memref<48x32xf32, #tpu.memory_space<vmem>>, %arg3: memref<32x128xf32, #tpu.memory_space<vmem>>, %arg4: memref<32x64xf32, #tpu.memory_space<vmem>>, %arg5: memref<64x32xf32, #tpu.memory_space<vmem>>, %arg6: memref<8x128xf32, #tpu.memory_space<vmem>>, %arg7: memref<32x320xf32, #tpu.memory_space<vmem>>, %arg8: memref<320x5xf32, #tpu.memory_space<vmem>>, %arg9: memref<2x320xf32, #tpu.memory_space<vmem>>, %arg10: memref<2x8x4xf32, #tpu.memory_space<vmem>>) attributes {dimension_semantics = [], scalar_prefetch = 0 : i64, scratch_operands = 0 : i64, tpu.core_type = #tpu.core_type<tc>} {
    %c0 = arith.constant 0 : index
    %c0_0 = arith.constant 0 : index
    %0 = vector.load %arg0[%c0, %c0_0] : memref<48x2xi32, #tpu.memory_space<vmem>>, vector<48x2xi32>
    %c0_1 = arith.constant 0 : index
    %c0_2 = arith.constant 0 : index
    %1 = vector.load %arg1[%c0_1, %c0_2] : memref<48x2xf32, #tpu.memory_space<vmem>>, vector<48x2xf32>
    %2 = tpu.iota {dimensions = array<i32: 1>} : vector<48x48xi32>
    %3 = vector.extract_strided_slice %0 {offsets = [0, 0], sizes = [48, 1], strides = [1, 1]} : vector<48x2xi32> to vector<48x1xi32>
    %4 = vector.broadcast %3 : vector<48x1xi32> to vector<48x48xi32>
    %5 = arith.cmpi eq, %2, %4 : vector<48x48xi32>
    %6 = arith.extui %5 : vector<48x48xi1> to vector<48x48xi32>
    %7 = arith.sitofp %6 : vector<48x48xi32> to vector<48x48xf32>
    %8 = vector.extract_strided_slice %1 {offsets = [0, 0], sizes = [48, 1], strides = [1, 1]} : vector<48x2xf32> to vector<48x1xf32>
    %9 = vector.broadcast %8 : vector<48x1xf32> to vector<48x48xf32>
    %10 = arith.mulf %7, %9 : vector<48x48xf32>
    %11 = vector.extract_strided_slice %0 {offsets = [0, 1], sizes = [48, 1], strides = [1, 1]} : vector<48x2xi32> to vector<48x1xi32>
    %12 = vector.broadcast %11 : vector<48x1xi32> to vector<48x48xi32>
    %13 = arith.cmpi eq, %2, %12 : vector<48x48xi32>
    %14 = arith.extui %13 : vector<48x48xi1> to vector<48x48xi32>
    %15 = arith.sitofp %14 : vector<48x48xi32> to vector<48x48xf32>
    %16 = vector.extract_strided_slice %1 {offsets = [0, 1], sizes = [48, 1], strides = [1, 1]} : vector<48x2xf32> to vector<48x1xf32>
    %17 = vector.broadcast %16 : vector<48x1xf32> to vector<48x48xf32>
    %18 = arith.mulf %15, %17 : vector<48x48xf32>
    %19 = arith.addf %10, %18 : vector<48x48xf32>
    %c0_3 = arith.constant 0 : index
    %c0_4 = arith.constant 0 : index
    %20 = vector.load %arg2[%c0_3, %c0_4] : memref<48x32xf32, #tpu.memory_space<vmem>>, vector<48x32xf32>
    %cst = arith.constant dense<0.000000e+00> : vector<48x32xf32>
    %21 = tpu.matmul %19, %20, %cst {dimension_numbers = #tpu.dot_dimension_numbers<[1], [0], [0], [1], [0, 0, 1, 1], [], []>} : vector<48x48xf32>, vector<48x32xf32>, vector<48x32xf32> -> vector<48x32xf32>
    %c0_5 = arith.constant 0 : index
    %c0_6 = arith.constant 0 : index
    %22 = vector.load %arg3[%c0_5, %c0_6] : memref<32x128xf32, #tpu.memory_space<vmem>>, vector<32x128xf32>
    %23 = vector.extract_strided_slice %22 {offsets = [0, 0], sizes = [32, 96], strides = [1, 1]} : vector<32x128xf32> to vector<32x96xf32>
    %cst_7 = arith.constant dense<0.000000e+00> : vector<48x96xf32>
    %24 = tpu.matmul %21, %23, %cst_7 {dimension_numbers = #tpu.dot_dimension_numbers<[1], [0], [0], [1], [0, 0, 1, 1], [], []>} : vector<48x32xf32>, vector<32x96xf32>, vector<48x96xf32> -> vector<48x96xf32>
    %c0_8 = arith.constant 0 : index
    %c0_9 = arith.constant 0 : index
    %25 = vector.load %arg6[%c0_8, %c0_9] : memref<8x128xf32, #tpu.memory_space<vmem>>, vector<1x96xf32>
    %26 = vector.broadcast %25 : vector<1x96xf32> to vector<48x96xf32>
    %27 = arith.addf %24, %26 : vector<48x96xf32>
    %28 = vector.extract_strided_slice %27 {offsets = [0, 0], sizes = [48, 32], strides = [1, 1]} : vector<48x96xf32> to vector<48x32xf32>
    %29 = vector.shape_cast %28 : vector<48x32xf32> to vector<2x24x32xf32>
    %30 = vector.extract_strided_slice %27 {offsets = [0, 32], sizes = [48, 32], strides = [1, 1]} : vector<48x96xf32> to vector<48x32xf32>
    %31 = vector.shape_cast %30 : vector<48x32xf32> to vector<2x24x32xf32>
    %32 = vector.extract_strided_slice %27 {offsets = [0, 64], sizes = [48, 32], strides = [1, 1]} : vector<48x96xf32> to vector<48x32xf32>
    %33 = vector.shape_cast %32 : vector<48x32xf32> to vector<2x24x32xf32>
    "tpu.trace_start"() <{level = 10 : i32, message = "bqd,bkd->bqk"}> : () -> ()
    %cst_10 = arith.constant dense<0.000000e+00> : vector<2x24x24xf32>
    %34 = tpu.matmul %29, %31, %cst_10 {dimension_numbers = #tpu.dot_dimension_numbers<[2], [2], [1], [1], [0, 0, 0, 1, 1, 1], [0], [0]>} : vector<2x24x32xf32>, vector<2x24x32xf32>, vector<2x24x24xf32> -> vector<2x24x24xf32>
    "tpu.trace_stop"() : () -> ()
    %cst_11 = arith.constant 0.176776692 : f32
    %35 = vector.broadcast %cst_11 : f32 to vector<2x24x24xf32>
    %36 = arith.mulf %34, %35 : vector<2x24x24xf32>
    %cst_12 = arith.constant dense<0xFF800000> : vector<2x24xf32>
    %37 = vector.multi_reduction <maximumf>, %36, %cst_12 [2] : vector<2x24x24xf32> to vector<2x24xf32>
    %38 = vector.shape_cast %37 : vector<2x24xf32> to vector<2x24x1xf32>
    %39 = vector.broadcast %38 : vector<2x24x1xf32> to vector<2x24x24xf32>
    %40 = arith.subf %36, %39 : vector<2x24x24xf32>
    %41 = math.exp %40 : vector<2x24x24xf32>
    %cst_13 = arith.constant dense<0.000000e+00> : vector<2x24xf32>
    %42 = vector.multi_reduction <add>, %41, %cst_13 [2] : vector<2x24x24xf32> to vector<2x24xf32>
    %43 = vector.shape_cast %42 : vector<2x24xf32> to vector<2x24x1xf32>
    %44 = tpu.reciprocal %43 {approx = true} : vector<2x24x1xf32> -> vector<2x24x1xf32>
    %45 = vector.broadcast %44 : vector<2x24x1xf32> to vector<2x24x24xf32>
    %46 = arith.mulf %41, %45 : vector<2x24x24xf32>
    "tpu.trace_start"() <{level = 10 : i32, message = "bqk,bkd->bqd"}> : () -> ()
    %cst_14 = arith.constant dense<0.000000e+00> : vector<2x24x32xf32>
    %47 = tpu.matmul %46, %33, %cst_14 {dimension_numbers = #tpu.dot_dimension_numbers<[2], [1], [1], [2], [0, 0, 0, 1, 1, 2], [0], [0]>} : vector<2x24x24xf32>, vector<2x24x32xf32>, vector<2x24x32xf32> -> vector<2x24x32xf32>
    "tpu.trace_stop"() : () -> ()
    %48 = vector.shape_cast %47 : vector<2x24x32xf32> to vector<48x32xf32>
    %49 = vector.extract_strided_slice %22 {offsets = [0, 96], sizes = [32, 32], strides = [1, 1]} : vector<32x128xf32> to vector<32x32xf32>
    %cst_15 = arith.constant dense<0.000000e+00> : vector<48x32xf32>
    %50 = tpu.matmul %48, %49, %cst_15 {dimension_numbers = #tpu.dot_dimension_numbers<[1], [0], [0], [1], [0, 0, 1, 1], [], []>} : vector<48x32xf32>, vector<32x32xf32>, vector<48x32xf32> -> vector<48x32xf32>
    %c1 = arith.constant 1 : index
    %c0_16 = arith.constant 0 : index
    %51 = vector.load %arg6[%c1, %c0_16] : memref<8x128xf32, #tpu.memory_space<vmem>>, vector<1x32xf32>
    %52 = vector.broadcast %51 : vector<1x32xf32> to vector<48x32xf32>
    %53 = arith.addf %50, %52 : vector<48x32xf32>
    %54 = arith.addf %21, %53 : vector<48x32xf32>
    %c2 = arith.constant 2 : index
    %c0_17 = arith.constant 0 : index
    %55 = vector.load %arg6[%c2, %c0_17] : memref<8x128xf32, #tpu.memory_space<vmem>>, vector<1x32xf32>
    %c3 = arith.constant 3 : index
    %c0_18 = arith.constant 0 : index
    %56 = vector.load %arg6[%c3, %c0_18] : memref<8x128xf32, #tpu.memory_space<vmem>>, vector<1x32xf32>
    %cst_19 = arith.constant dense<0.000000e+00> : vector<48xf32>
    %57 = vector.multi_reduction <add>, %54, %cst_19 [1] : vector<48x32xf32> to vector<48xf32>
    %58 = vector.shape_cast %57 : vector<48xf32> to vector<48x1xf32>
    %cst_20 = arith.constant 3.200000e+01 : f32
    %59 = vector.broadcast %cst_20 : f32 to vector<48x1xf32>
    %60 = arith.divf %58, %59 : vector<48x1xf32>
    %61 = vector.broadcast %60 : vector<48x1xf32> to vector<48x32xf32>
    %62 = arith.subf %54, %61 : vector<48x32xf32>
    %63 = arith.mulf %62, %62 : vector<48x32xf32>
    %cst_21 = arith.constant dense<0.000000e+00> : vector<48xf32>
    %64 = vector.multi_reduction <add>, %63, %cst_21 [1] : vector<48x32xf32> to vector<48xf32>
    %65 = vector.shape_cast %64 : vector<48xf32> to vector<48x1xf32>
    %cst_22 = arith.constant 3.200000e+01 : f32
    %66 = vector.broadcast %cst_22 : f32 to vector<48x1xf32>
    %67 = arith.divf %65, %66 : vector<48x1xf32>
    %68 = vector.broadcast %60 : vector<48x1xf32> to vector<48x32xf32>
    %69 = arith.subf %54, %68 : vector<48x32xf32>
    %cst_23 = arith.constant 9.99999974E-6 : f32
    %70 = vector.broadcast %cst_23 : f32 to vector<48x1xf32>
    %71 = arith.addf %67, %70 : vector<48x1xf32>
    %72 = math.rsqrt %71 : vector<48x1xf32>
    %73 = vector.broadcast %72 : vector<48x1xf32> to vector<48x32xf32>
    %74 = arith.mulf %69, %73 : vector<48x32xf32>
    %75 = vector.broadcast %55 : vector<1x32xf32> to vector<48x32xf32>
    %76 = arith.mulf %74, %75 : vector<48x32xf32>
    %77 = vector.broadcast %56 : vector<1x32xf32> to vector<48x32xf32>
    %78 = arith.addf %76, %77 : vector<48x32xf32>
    %c0_24 = arith.constant 0 : index
    %c0_25 = arith.constant 0 : index
    %79 = vector.load %arg4[%c0_24, %c0_25] : memref<32x64xf32, #tpu.memory_space<vmem>>, vector<32x64xf32>
    %cst_26 = arith.constant dense<0.000000e+00> : vector<48x64xf32>
    %80 = tpu.matmul %78, %79, %cst_26 {dimension_numbers = #tpu.dot_dimension_numbers<[1], [0], [0], [1], [0, 0, 1, 1], [], []>} : vector<48x32xf32>, vector<32x64xf32>, vector<48x64xf32> -> vector<48x64xf32>
    %c4 = arith.constant 4 : index
    %c0_27 = arith.constant 0 : index
    %81 = vector.load %arg6[%c4, %c0_27] : memref<8x128xf32, #tpu.memory_space<vmem>>, vector<1x64xf32>
    %82 = vector.broadcast %81 : vector<1x64xf32> to vector<48x64xf32>
    %83 = arith.addf %80, %82 : vector<48x64xf32>
    %cst_28 = arith.constant 0.000000e+00 : f32
    %84 = vector.broadcast %cst_28 : f32 to vector<48x64xf32>
    %85 = arith.maximumf %83, %84 : vector<48x64xf32>
    %c0_29 = arith.constant 0 : index
    %c0_30 = arith.constant 0 : index
    %86 = vector.load %arg5[%c0_29, %c0_30] : memref<64x32xf32, #tpu.memory_space<vmem>>, vector<64x32xf32>
    %cst_31 = arith.constant dense<0.000000e+00> : vector<48x32xf32>
    %87 = tpu.matmul %85, %86, %cst_31 {dimension_numbers = #tpu.dot_dimension_numbers<[1], [0], [0], [1], [0, 0, 1, 1], [], []>} : vector<48x64xf32>, vector<64x32xf32>, vector<48x32xf32> -> vector<48x32xf32>
    %c5 = arith.constant 5 : index
    %c0_32 = arith.constant 0 : index
    %88 = vector.load %arg6[%c5, %c0_32] : memref<8x128xf32, #tpu.memory_space<vmem>>, vector<1x32xf32>
    %89 = vector.broadcast %88 : vector<1x32xf32> to vector<48x32xf32>
    %90 = arith.addf %87, %89 : vector<48x32xf32>
    %91 = arith.addf %78, %90 : vector<48x32xf32>
    %c6 = arith.constant 6 : index
    %c0_33 = arith.constant 0 : index
    %92 = vector.load %arg6[%c6, %c0_33] : memref<8x128xf32, #tpu.memory_space<vmem>>, vector<1x32xf32>
    %c7 = arith.constant 7 : index
    %c0_34 = arith.constant 0 : index
    %93 = vector.load %arg6[%c7, %c0_34] : memref<8x128xf32, #tpu.memory_space<vmem>>, vector<1x32xf32>
    %cst_35 = arith.constant dense<0.000000e+00> : vector<48xf32>
    %94 = vector.multi_reduction <add>, %91, %cst_35 [1] : vector<48x32xf32> to vector<48xf32>
    %95 = vector.shape_cast %94 : vector<48xf32> to vector<48x1xf32>
    %cst_36 = arith.constant 3.200000e+01 : f32
    %96 = vector.broadcast %cst_36 : f32 to vector<48x1xf32>
    %97 = arith.divf %95, %96 : vector<48x1xf32>
    %98 = vector.broadcast %97 : vector<48x1xf32> to vector<48x32xf32>
    %99 = arith.subf %91, %98 : vector<48x32xf32>
    %100 = arith.mulf %99, %99 : vector<48x32xf32>
    %cst_37 = arith.constant dense<0.000000e+00> : vector<48xf32>
    %101 = vector.multi_reduction <add>, %100, %cst_37 [1] : vector<48x32xf32> to vector<48xf32>
    %102 = vector.shape_cast %101 : vector<48xf32> to vector<48x1xf32>
    %cst_38 = arith.constant 3.200000e+01 : f32
    %103 = vector.broadcast %cst_38 : f32 to vector<48x1xf32>
    %104 = arith.divf %102, %103 : vector<48x1xf32>
    %105 = vector.broadcast %97 : vector<48x1xf32> to vector<48x32xf32>
    %106 = arith.subf %91, %105 : vector<48x32xf32>
    %cst_39 = arith.constant 9.99999974E-6 : f32
    %107 = vector.broadcast %cst_39 : f32 to vector<48x1xf32>
    %108 = arith.addf %104, %107 : vector<48x1xf32>
    %109 = math.rsqrt %108 : vector<48x1xf32>
    %110 = vector.broadcast %109 : vector<48x1xf32> to vector<48x32xf32>
    %111 = arith.mulf %106, %110 : vector<48x32xf32>
    %112 = vector.broadcast %92 : vector<1x32xf32> to vector<48x32xf32>
    %113 = arith.mulf %111, %112 : vector<48x32xf32>
    %114 = vector.broadcast %93 : vector<1x32xf32> to vector<48x32xf32>
    %115 = arith.addf %113, %114 : vector<48x32xf32>
    %116 = vector.shape_cast %115 : vector<48x32xf32> to vector<2x24x32xf32>
    %117 = vector.extract_strided_slice %116 {offsets = [0, 16, 0], sizes = [2, 8, 32], strides = [1, 1, 1]} : vector<2x24x32xf32> to vector<2x8x32xf32>
    %118 = vector.shape_cast %117 : vector<2x8x32xf32> to vector<16x32xf32>
    %119 = vector.extract_strided_slice %0 {offsets = [0, 0], sizes = [48, 1], strides = [1, 1]} : vector<48x2xi32> to vector<48x1xi32>
    %120 = vector.shape_cast %119 : vector<48x1xi32> to vector<2x24x1xi32>
    %121 = vector.extract_strided_slice %120 {offsets = [0, 16, 0], sizes = [2, 8, 1], strides = [1, 1, 1]} : vector<2x24x1xi32> to vector<2x8x1xi32>
    %c42_i32 = arith.constant 42 : i32
    %122 = vector.broadcast %c42_i32 : i32 to vector<2x8x1xi32>
    %123 = arith.cmpi slt, %121, %122 : vector<2x8x1xi32>
    %124 = arith.extui %123 : vector<2x8x1xi1> to vector<2x8x1xi32>
    %125 = arith.sitofp %124 : vector<2x8x1xi32> to vector<2x8x1xf32>
    %c0_40 = arith.constant 0 : index
    %c0_41 = arith.constant 0 : index
    %126 = vector.load %arg7[%c0_40, %c0_41] : memref<32x320xf32, #tpu.memory_space<vmem>>, vector<32x320xf32>
    %cst_42 = arith.constant dense<0.000000e+00> : vector<16x320xf32>
    %127 = tpu.matmul %118, %126, %cst_42 {dimension_numbers = #tpu.dot_dimension_numbers<[1], [0], [0], [1], [0, 0, 1, 1], [], []>} : vector<16x32xf32>, vector<32x320xf32>, vector<16x320xf32> -> vector<16x320xf32>
    %c0_43 = arith.constant 0 : index
    %c0_44 = arith.constant 0 : index
    %128 = vector.load %arg9[%c0_43, %c0_44] : memref<2x320xf32, #tpu.memory_space<vmem>>, vector<1x320xf32>
    %129 = vector.broadcast %128 : vector<1x320xf32> to vector<16x320xf32>
    %130 = arith.addf %127, %129 : vector<16x320xf32>
    %cst_45 = arith.constant 0.000000e+00 : f32
    %131 = vector.broadcast %cst_45 : f32 to vector<16x320xf32>
    %132 = arith.maximumf %130, %131 : vector<16x320xf32>
    %c0_46 = arith.constant 0 : index
    %c0_47 = arith.constant 0 : index
    %133 = vector.load %arg8[%c0_46, %c0_47] : memref<320x5xf32, #tpu.memory_space<vmem>>, vector<320x5xf32>
    %cst_48 = arith.constant dense<0.000000e+00> : vector<16x5xf32>
    %134 = tpu.matmul %132, %133, %cst_48 {dimension_numbers = #tpu.dot_dimension_numbers<[1], [0], [0], [1], [0, 0, 1, 1], [], []>} : vector<16x320xf32>, vector<320x5xf32>, vector<16x5xf32> -> vector<16x5xf32>
    %c1_49 = arith.constant 1 : index
    %c0_50 = arith.constant 0 : index
    %135 = vector.load %arg9[%c1_49, %c0_50] : memref<2x320xf32, #tpu.memory_space<vmem>>, vector<1x5xf32>
    %136 = vector.broadcast %135 : vector<1x5xf32> to vector<16x5xf32>
    %137 = arith.addf %134, %136 : vector<16x5xf32>
    %138 = vector.extract_strided_slice %137 {offsets = [0, 0], sizes = [16, 1], strides = [1, 1]} : vector<16x5xf32> to vector<16x1xf32>
    %139 = vector.shape_cast %138 : vector<16x1xf32> to vector<2x8x1xf32>
    %140 = arith.mulf %139, %125 : vector<2x8x1xf32>
    %cst_51 = arith.constant dense<0.000000e+00> : vector<2x1xf32>
    %141 = vector.multi_reduction <add>, %140, %cst_51 [1] : vector<2x8x1xf32> to vector<2x1xf32>
    %142 = vector.shape_cast %141 : vector<2x1xf32> to vector<2x1x1xf32>
    %cst_52 = arith.constant dense<0.000000e+00> : vector<2x1xf32>
    %143 = vector.multi_reduction <add>, %125, %cst_52 [1] : vector<2x8x1xf32> to vector<2x1xf32>
    %144 = vector.shape_cast %143 : vector<2x1xf32> to vector<2x1x1xf32>
    %cst_53 = arith.constant 1.000000e+00 : f32
    %145 = vector.broadcast %cst_53 : f32 to vector<2x1x1xf32>
    %146 = arith.maximumf %144, %145 : vector<2x1x1xf32>
    %147 = tpu.reciprocal %146 {approx = true} : vector<2x1x1xf32> -> vector<2x1x1xf32>
    %148 = arith.mulf %142, %147 : vector<2x1x1xf32>
    %149 = vector.extract_strided_slice %137 {offsets = [0, 1], sizes = [16, 4], strides = [1, 1]} : vector<16x5xf32> to vector<16x4xf32>
    %150 = vector.shape_cast %149 : vector<16x4xf32> to vector<2x8x4xf32>
    %151 = vector.broadcast %148 : vector<2x1x1xf32> to vector<2x8x4xf32>
    %152 = arith.addf %151, %150 : vector<2x8x4xf32>
    %cst_54 = arith.constant 5.000000e-01 : f32
    %153 = vector.broadcast %cst_54 : f32 to vector<2x8x1xf32>
    %154 = arith.cmpf ogt, %125, %153 : vector<2x8x1xf32>
    %cst_55 = arith.constant 0xFF800000 : f32
    %155 = vector.shape_cast %154 : vector<2x8x1xi1> to vector<2x8x1xi1>
    %156 = vector.broadcast %155 : vector<2x8x1xi1> to vector<2x8x4xi1>
    %157 = vector.broadcast %cst_55 : f32 to vector<2x8x4xf32>
    %158 = arith.select %156, %152, %157 : vector<2x8x4xi1>, vector<2x8x4xf32>
    %c0_56 = arith.constant 0 : index
    %c0_57 = arith.constant 0 : index
    %c0_58 = arith.constant 0 : index
    %159 = vector.load %arg10[%c0_56, %c0_57, %c0_58] : memref<2x8x4xf32, #tpu.memory_space<vmem>>, vector<2x8x4xf32>
    tpu.vector_store %arg10[%c0_56, %c0_57, %c0_58], %158 {strides = array<i32>} : memref<2x8x4xf32, #tpu.memory_space<vmem>>, vector<2x8x4xf32>,
    return
  }
}

</mosaic_0001>

<llo_original>
// kernel: theta_model_forward.1
$region0: #{theta_model_forward.1}
  #allocation0 [shape = 'u32[]', space=smem, size = 0x4, offset = 0x4, fixed_abs, tag = 'smem constant byte address 0x4 - core index']
  #allocation1 [shape = 'u32[144,128]{1,0:T(1,128)}', space=vmem, size = 0x12000, scoped, tag = 'internal scratch']
  %s0 = inlined_call_operand.vmem [shape: s32[48,2], index: 0, kind: input, shape index: {}]
  %s1 = inlined_call_operand.vmem [shape: f32[48,2], index: 1, kind: input, shape index: {}]
  %s2 = inlined_call_operand.vmem [shape: f32[48,32], index: 2, kind: input, shape index: {}]
  %s3 = inlined_call_operand.vmem [shape: f32[32,128], index: 3, kind: input, shape index: {}]
  %s4 = inlined_call_operand.vmem [shape: f32[32,64], index: 4, kind: input, shape index: {}]
  %s5 = inlined_call_operand.vmem [shape: f32[64,32], index: 5, kind: input, shape index: {}]
  %s6 = inlined_call_operand.vmem [shape: f32[8,128], index: 6, kind: input, shape index: {}]
  %s7 = inlined_call_operand.vmem [shape: f32[32,320], index: 7, kind: input, shape index: {}]
  %s8 = inlined_call_operand.vmem [shape: f32[320,5], index: 8, kind: input, shape index: {}]
  %s9 = inlined_call_operand.vmem [shape: f32[2,320], index: 9, kind: input, shape index: {}]
  %s10 = inlined_call_operand.vmem [shape: f32[2,8,4], index: 10, kind: output, shape index: {}]
  %s11 = sld [smem:[#allocation0]]
  $region50: #{theta_model_forward.1} parent=0
    _
  %s13 = ssub.s32 1, %s11
  %s14 = scalar_select 0, %s13, %s11
  // Predicated region
  $region2: #{theta_model_forward.1} parent=0 // pred_check
    _
  $region3: #{theta_model_forward.1} parent=0 // pred_check_branch
    %16 = sbr.rel (0) target = $region5
  $region4: #{theta_model_forward.1} parent=0 // pred_region
    _
  $region5: #{theta_model_forward.1} parent=0 // pred_fallthru
    _
  // Predicated region
  $region6: #{theta_model_forward.1} parent=0 // pred_check
    _
  $region7: #{theta_model_forward.1} parent=0 // pred_check_branch
    %18 = sbr.rel (0) target = $region9
  $region8: #{theta_model_forward.1} parent=0 // pred_region
    _
  $region9: #{theta_model_forward.1} parent=0 // pred_fallthru
    _
  // Predicated region
  $region10: #{theta_model_forward.1} parent=0 // pred_check
    _
  $region11: #{theta_model_forward.1} parent=0 // pred_check_branch
    %20 = sbr.rel (0) target = $region13
  $region12: #{theta_model_forward.1} parent=0 // pred_region
    _
  $region13: #{theta_model_forward.1} parent=0 // pred_fallthru
    _
  // Predicated region
  $region14: #{theta_model_forward.1} parent=0 // pred_check
    _
  $region15: #{theta_model_forward.1} parent=0 // pred_check_branch
    %22 = sbr.rel (0) target = $region17
  $region16: #{theta_model_forward.1} parent=0 // pred_region
    _
  $region17: #{theta_model_forward.1} parent=0 // pred_fallthru
    _
  // Predicated region
  $region18: #{theta_model_forward.1} parent=0 // pred_check
    _
  $region19: #{theta_model_forward.1} parent=0 // pred_check_branch
    %24 = sbr.rel (0) target = $region21
  $region20: #{theta_model_forward.1} parent=0 // pred_region
    _
  $region21: #{theta_model_forward.1} parent=0 // pred_fallthru
    _
  // Predicated region
  $region22: #{theta_model_forward.1} parent=0 // pred_check
    _
  $region23: #{theta_model_forward.1} parent=0 // pred_check_branch
    %26 = sbr.rel (0) target = $region25
  $region24: #{theta_model_forward.1} parent=0 // pred_region
    _
  $region25: #{theta_model_forward.1} parent=0 // pred_fallthru
    _
  // Predicated region
  $region26: #{theta_model_forward.1} parent=0 // pred_check
    _
  $region27: #{theta_model_forward.1} parent=0 // pred_check_branch
    %28 = sbr.rel (0) target = $region29
  $region28: #{theta_model_forward.1} parent=0 // pred_region
    _
  $region29: #{theta_model_forward.1} parent=0 // pred_fallthru
    _
  // Predicated region
  $region30: #{theta_model_forward.1} parent=0 // pred_check
    _
  $region31: #{theta_model_forward.1} parent=0 // pred_check_branch
    %30 = sbr.rel (0) target = $region33
  $region32: #{theta_model_forward.1} parent=0 // pred_region
    _
  $region33: #{theta_model_forward.1} parent=0 // pred_fallthru
    _
  // Predicated region
  $region34: #{theta_model_forward.1} parent=0 // pred_check
    _
  $region35: #{theta_model_forward.1} parent=0 // pred_check_branch
    %32 = sbr.rel (0) target = $region37
  $region36: #{theta_model_forward.1} parent=0 // pred_region
    _
  $region37: #{theta_model_forward.1} parent=0 // pred_fallthru
    _
  // Predicated region
  $region38: #{theta_model_forward.1} parent=0 // pred_check
    _
  $region39: #{theta_model_forward.1} parent=0 // pred_check_branch
    %34 = sbr.rel (0) target = $region41
  $region40: #{theta_model_forward.1} parent=0 // pred_region
    _
  $region41: #{theta_model_forward.1} parent=0 // pred_fallthru
    _
  %v35 = vld [vmem:[%s0] sm:$0xff]
  %v36 = vld [vmem:[%s0 + $0x8] sm:$0xff]
  %v37 = vld [vmem:[%s0 + $0x10] sm:$0xff]
  %v38 = vld [vmem:[%s0 + $0x18] sm:$0xff]
  %v39 = vld [vmem:[%s0 + $0x20] sm:$0xff]
  %v40 = vld [vmem:[%s0 + $0x28] sm:$0xff]
  %v41 = vld [vmem:[%s1] sm:$0xff]
  %v42 = vld [vmem:[%s1 + $0x8] sm:$0xff]
  %v43 = vld [vmem:[%s1 + $0x10] sm:$0xff]
  %v44 = vld [vmem:[%s1 + $0x18] sm:$0xff]
  %v45 = vld [vmem:[%s1 + $0x20] sm:$0xff]
  %v46 = vld [vmem:[%s1 + $0x28] sm:$0xff]
  %v47 = vlaneseq
  %v48 = vand.u32 %v47, 127
  %49 = vset.pattern.permute.xlu0 0
  %50 = vperm.xlu0 %49, %v35
  %v51 = vpop.permute.xlu0 %50
  %52 = vset.pattern.permute.xlu0 0
  %53 = vperm.xlu0 %52, %v36
  %v54 = vpop.permute.xlu0 %53
  %55 = vset.pattern.permute.xlu0 0
  %56 = vperm.xlu0 %55, %v37
  %v57 = vpop.permute.xlu0 %56
  %58 = vset.pattern.permute.xlu0 0
  %59 = vperm.xlu0 %58, %v38
  %v60 = vpop.permute.xlu0 %59
  %61 = vset.pattern.permute.xlu0 0
  %62 = vperm.xlu0 %61, %v39
  %v63 = vpop.permute.xlu0 %62
  %64 = vset.pattern.permute.xlu0 0
  %65 = vperm.xlu0 %64, %v40
  %v66 = vpop.permute.xlu0 %65
  %vm67 = vcmp.eq.s32.totalorder %v48, %v51
  %vm68 = vcmp.eq.s32.totalorder %v48, %v54
  %vm69 = vcmp.eq.s32.totalorder %v48, %v57
  %vm70 = vcmp.eq.s32.totalorder %v48, %v60
  %vm71 = vcmp.eq.s32.totalorder %v48, %v63
  %vm72 = vcmp.eq.s32.totalorder %v48, %v66
  %v73 = vsel %vm67, 1, 0
  %v74 = vsel %vm68, 1, 0
  %v75 = vsel %vm69, 1, 0
  %v76 = vsel %vm70, 1, 0
  %v77 = vsel %vm71, 1, 0
  %v78 = vsel %vm72, 1, 0
  %v79 = vcvt.s32.f32 %v73
  %v80 = vcvt.s32.f32 %v74
  %v81 = vcvt.s32.f32 %v75
  %v82 = vcvt.s32.f32 %v76
  %v83 = vcvt.s32.f32 %v77
  %v84 = vcvt.s32.f32 %v78
  %86 = vset.pattern.permute.xlu0 0
  %87 = vperm.xlu0 %86, %v41
  %v88 = vpop.permute.xlu0 %87
  %91 = vset.pattern.permute.xlu0 0
  %92 = vperm.xlu0 %91, %v42
  %v93 = vpop.permute.xlu0 %92
  %96 = vset.pattern.permute.xlu0 0
  %97 = vperm.xlu0 %96, %v43
  %v98 = vpop.permute.xlu0 %97
  %101 = vset.pattern.permute.xlu0 0
  %102 = vperm.xlu0 %101, %v44
  %v103 = vpop.permute.xlu0 %102
  %106 = vset.pattern.permute.xlu0 0
  %107 = vperm.xlu0 %106, %v45
  %v108 = vpop.permute.xlu0 %107
  %111 = vset.pattern.permute.xlu0 0
  %112 = vperm.xlu0 %111, %v46
  %v113 = vpop.permute.xlu0 %112
  %v115 = vmul.f32 %v79, %v88
  %v116 = vmul.f32 %v80, %v93
  %v117 = vmul.f32 %v81, %v98
  %v118 = vmul.f32 %v82, %v103
  %v119 = vmul.f32 %v83, %v108
  %v120 = vmul.f32 %v84, %v113
  %121 = vset.pattern.permute.xlu0 1
  %122 = vperm.xlu0 %121, %v35
  %v123 = vpop.permute.xlu0 %122
  %124 = vset.pattern.permute.xlu0 1
  %125 = vperm.xlu0 %124, %v36
  %v126 = vpop.permute.xlu0 %125
  %127 = vset.pattern.permute.xlu0 1
  %128 = vperm.xlu0 %127, %v37
  %v129 = vpop.permute.xlu0 %128
  %130 = vset.pattern.permute.xlu0 1
  %131 = vperm.xlu0 %130, %v38
  %v132 = vpop.permute.xlu0 %131
  %133 = vset.pattern.permute.xlu0 1
  %134 = vperm.xlu0 %133, %v39
  %v135 = vpop.permute.xlu0 %134
  %136 = vset.pattern.permute.xlu0 1
  %137 = vperm.xlu0 %136, %v40
  %v138 = vpop.permute.xlu0 %137
  %vm139 = vcmp.eq.s32.totalorder %v48, %v123
  %vm140 = vcmp.eq.s32.totalorder %v48, %v126
  %vm141 = vcmp.eq.s32.totalorder %v48, %v129
  %vm142 = vcmp.eq.s32.totalorder %v48, %v132
  %vm143 = vcmp.eq.s32.totalorder %v48, %v135
  %vm144 = vcmp.eq.s32.totalorder %v48, %v138
  %v145 = vsel %vm139, 1, 0
  %v146 = vsel %vm140, 1, 0
  %v147 = vsel %vm141, 1, 0
  %v148 = vsel %vm142, 1, 0
  %v149 = vsel %vm143, 1, 0
  %v150 = vsel %vm144, 1, 0
  %v151 = vcvt.s32.f32 %v145
  %v152 = vcvt.s32.f32 %v146
  %v153 = vcvt.s32.f32 %v147
  %v154 = vcvt.s32.f32 %v148
  %v155 = vcvt.s32.f32 %v149
  %v156 = vcvt.s32.f32 %v150
  %157 = vset.pattern.permute.xlu0 1
  %158 = vperm.xlu0 %157, %v41
  %v159 = vpop.permute.xlu0 %158
  %161 = vset.pattern.permute.xlu0 1
  %162 = vperm.xlu0 %161, %v42
  %v163 = vpop.permute.xlu0 %162
  %165 = vset.pattern.permute.xlu0 1
  %166 = vperm.xlu0 %165, %v43
  %v167 = vpop.permute.xlu0 %166
  %169 = vset.pattern.permute.xlu0 1
  %170 = vperm.xlu0 %169, %v44
  %v171 = vpop.permute.xlu0 %170
  %173 = vset.pattern.permute.xlu0 1
  %174 = vperm.xlu0 %173, %v45
  %v175 = vpop.permute.xlu0 %174
  %177 = vset.pattern.permute.xlu0 1
  %178 = vperm.xlu0 %177, %v46
  %v179 = vpop.permute.xlu0 %178
  %v181 = vmul.f32 %v151, %v159
  %v182 = vmul.f32 %v152, %v163
  %v183 = vmul.f32 %v153, %v167
  %v184 = vmul.f32 %v154, %v171
  %v185 = vmul.f32 %v155, %v175
  %v186 = vmul.f32 %v156, %v179
  %v187 = vadd.f32 %v115, %v181
  %v188 = vadd.f32 %v116, %v182
  %v189 = vadd.f32 %v117, %v183
  %v190 = vadd.f32 %v118, %v184
  %v191 = vadd.f32 %v119, %v185
  %v192 = vadd.f32 %v120, %v186
  %v193 = vld [vmem:[%s2] sm:$0xff]
  %v194 = vld [vmem:[%s2 + $0x8] sm:$0xff]
  %v195 = vld [vmem:[%s2 + $0x10] sm:$0xff]
  %v196 = vld [vmem:[%s2 + $0x18] sm:$0xff]
  %v197 = vld [vmem:[%s2 + $0x20] sm:$0xff]
  %v198 = vld [vmem:[%s2 + $0x28] sm:$0xff]
  %vm199 = vcmask 392192
  %v201 = vsel %vm199, %v187, 0
  %v204 = vsel %vm199, %v188, 0
  %v207 = vsel %vm199, %v189, 0
  %v210 = vsel %vm199, %v190, 0
  %v213 = vsel %vm199, %v191, 0
  %v216 = vsel %vm199, %v192, 0
  %218 = vmatprep.subr.mxu0 0.0
  %219 = vmatpush1.msra.mxu0 0.0
  %220 = vmatprep.subr.mxu0 0.0
  %221 = vmatpush1.msra.mxu0 0.0
  %222 = vmatprep.subr.mxu0 0.0
  %223 = vmatpush1.msra.mxu0 0.0
  %224 = vmatprep.subr.mxu0 0.0
  %225 = vmatpush1.msra.mxu0 0.0
  %226 = vmatprep.subr.mxu0 0.0
  %227 = vmatpush1.msra.mxu0 0.0
  %228 = vmatprep.subr.mxu0 0.0
  %229 = vmatpush1.msra.mxu0 0.0
  %230 = vmatprep.subr.mxu0 0.0
  %231 = vmatpush1.msra.mxu0 0.0
  %232 = vmatprep.subr.mxu0 0.0
  %233 = vmatpush1.msra.mxu0 0.0
  %234 = vmatprep.subr.mxu0 0.0
  %235 = vmatpush1.msra.mxu0 0.0
  %236 = vmatprep.subr.mxu0 0.0
  %237 = vmatpush1.msra.mxu0 0.0
  %238 = vmatprep.subr.mxu0 0.0
  %239 = vmatpush1.msra.mxu0 %v198
  %240 = vmatprep.subr.mxu0 0.0
  %241 = vmatpush1.msra.mxu0 %v197
  %242 = vmatprep.subr.mxu0 0.0
  %243 = vmatpush1.msra.mxu0 %v196
  %244 = vmatprep.subr.mxu0 0.0
  %245 = vmatpush1.msra.mxu0 %v195
  %246 = vmatprep.subr.mxu0 0.0
  %247 = vmatpush1.msra.mxu0 %v194
  %248 = vmatprep.subr.mxu0 0.0
  %249 = vmatpush1.msra.mxu0 %v193
  %250 = vmatprep.subr.mxu0 0.0
  %251 = vmatpush2.msra.mxu0 0.0
  %252 = vmatprep.subr.mxu0 0.0
  %253 = vmatpush2.msra.mxu0 0.0
  %254 = vmatprep.subr.mxu0 0.0
  %255 = vmatpush2.msra.mxu0 0.0
  %256 = vmatprep.subr.mxu0 0.0
  %257 = vmatpush2.msra.mxu0 0.0
  %258 = vmatprep.subr.mxu0 0.0
  %259 = vmatpush2.msra.mxu0 0.0
  %260 = vmatprep.subr.mxu0 0.0
  %261 = vmatpush2.msra.mxu0 0.0
  %262 = vmatprep.subr.mxu0 0.0
  %263 = vmatpush2.msra.mxu0 0.0
  %264 = vmatprep.subr.mxu0 0.0
  %265 = vmatpush2.msra.mxu0 0.0
  %266 = vmatprep.subr.mxu0 0.0
  %267 = vmatpush2.msra.mxu0 0.0
  %268 = vmatprep.subr.mxu0 0.0
  %269 = vmatpush2.msra.mxu0 0.0
  %270 = vmatprep.subr.mxu0 0.0
  %271 = vmatpush2.msra.mxu0 0.0
  %272 = vmatprep.subr.mxu0 0.0
  %273 = vmatpush2.msra.mxu0 0.0
  %274 = vmatprep.subr.mxu0 0.0
  %275 = vmatpush2.msra.mxu0 0.0
  %276 = vmatprep.subr.mxu0 0.0
  %277 = vmatpush2.msra.mxu0 0.0
  %278 = vmatprep.subr.mxu0 0.0
  %279 = vmatpush2.msra.mxu0 0.0
  %280 = vmatprep.subr.mxu0 0.0
  %281 = vmatpush2.msra.mxu0 0.0
  %282 = vmatprep.mubr.f32.mxu0 0.0
  %283 = vmatmul.mubr.f32.gmra.mxu0 %v201
  %v284 = vpop.f32.mrf.mxu0
  %v285 = vadd.f32 0.0, %v284
  %v286 = vpop.f32.mrf.mxu0
  %287 = vmatprep.mubr.f32.mxu0 0.0
  %288 = vmatmul.mubr.f32.gmra.mxu0 %v204
  %v289 = vpop.f32.mrf.mxu0
  %v290 = vadd.f32 0.0, %v289
  %v291 = vpop.f32.mrf.mxu0
  %292 = vmatprep.mubr.f32.mxu0 0.0
  %293 = vmatmul.mubr.f32.gmra.mxu0 %v207
  %v294 = vpop.f32.mrf.mxu0
  %v295 = vadd.f32 0.0, %v294
  %v296 = vpop.f32.mrf.mxu0
  %297 = vmatprep.mubr.f32.mxu0 0.0
  %298 = vmatmul.mubr.f32.gmra.mxu0 %v210
  %v299 = vpop.f32.mrf.mxu0
  %v300 = vadd.f32 0.0, %v299
  %v301 = vpop.f32.mrf.mxu0
  %302 = vmatprep.mubr.f32.mxu0 0.0
  %303 = vmatmul.mubr.f32.gmra.mxu0 %v213
  %v304 = vpop.f32.mrf.mxu0
  %v305 = vadd.f32 0.0, %v304
  %v306 = vpop.f32.mrf.mxu0
  %307 = vmatprep.mubr.f32.mxu0 0.0
  %308 = vmatmul.mubr.f32.gmra.mxu0 %v216
  %v309 = vpop.f32.mrf.mxu0
  %v310 = vadd.f32 0.0, %v309
  %v311 = vpop.f32.mrf.mxu0
  %312 = vdwg.mxu0
  %v313 = vld [vmem:[%s3] sm:$0xff]
  %v314 = vld [vmem:[%s3 + $0x8] sm:$0xff]
  %v315 = vld [vmem:[%s3 + $0x10] sm:$0xff]
  %v316 = vld [vmem:[%s3 + $0x18] sm:$0xff]
  %v317 = vld [vmem:[%s6] sm:$0x1]
  %v318 = vlaneseq
  %v319 = vshrl.u32 %v318, 7
  %v320 = vsub.s32 0, %v319
  %v321 = vrot.slane %v317, %v320
  %vm322 = vcmask 261120
  %v324 = vsel %vm322, %v285, 0
  %v327 = vsel %vm322, %v290, 0
  %v330 = vsel %vm322, %v295, 0
  %v333 = vsel %vm322, %v300, 0
  %v336 = vsel %vm322, %v305, 0
  %v339 = vsel %vm322, %v310, 0
  %341 = vmatprep.subr.mxu0 0.0
  %342 = vmatpush1.msra.mxu0 0.0
  %343 = vmatprep.subr.mxu0 0.0
  %344 = vmatpush1.msra.mxu0 0.0
  %345 = vmatprep.subr.mxu0 0.0
  %346 = vmatpush1.msra.mxu0 0.0
  %347 = vmatprep.subr.mxu0 0.0
  %348 = vmatpush1.msra.mxu0 0.0
  %349 = vmatprep.subr.mxu0 0.0
  %350 = vmatpush1.msra.mxu0 0.0
  %351 = vmatprep.subr.mxu0 0.0
  %352 = vmatpush1.msra.mxu0 0.0
  %353 = vmatprep.subr.mxu0 0.0
  %354 = vmatpush1.msra.mxu0 0.0
  %355 = vmatprep.subr.mxu0 0.0
  %356 = vmatpush1.msra.mxu0 0.0
  %357 = vmatprep.subr.mxu0 0.0
  %358 = vmatpush1.msra.mxu0 0.0
  %359 = vmatprep.subr.mxu0 0.0
  %360 = vmatpush1.msra.mxu0 0.0
  %361 = vmatprep.subr.mxu0 0.0
  %362 = vmatpush1.msra.mxu0 0.0
  %363 = vmatprep.subr.mxu0 0.0
  %364 = vmatpush1.msra.mxu0 0.0
  %365 = vmatprep.subr.mxu0 0.0
  %366 = vmatpush1.msra.mxu0 %v316
  %367 = vmatprep.subr.mxu0 0.0
  %368 = vmatpush1.msra.mxu0 %v315
  %369 = vmatprep.subr.mxu0 0.0
  %370 = vmatpush1.msra.mxu0 %v314
  %371 = vmatprep.subr.mxu0 0.0
  %372 = vmatpush1.msra.mxu0 %v313
  %373 = vmatprep.subr.mxu0 0.0
  %374 = vmatpush2.msra.mxu0 0.0
  %375 = vmatprep.subr.mxu0 0.0
  %376 = vmatpush2.msra.mxu0 0.0
  %377 = vmatprep.subr.mxu0 0.0
  %378 = vmatpush2.msra.mxu0 0.0
  %379 = vmatprep.subr.mxu0 0.0
  %380 = vmatpush2.msra.mxu0 0.0
  %381 = vmatprep.subr.mxu0 0.0
  %382 = vmatpush2.msra.mxu0 0.0
  %383 = vmatprep.subr.mxu0 0.0
  %384 = vmatpush2.msra.mxu0 0.0
  %385 = vmatprep.subr.mxu0 0.0
  %386 = vmatpush2.msra.mxu0 0.0
  %387 = vmatprep.subr.mxu0 0.0
  %388 = vmatpush2.msra.mxu0 0.0
  %389 = vmatprep.subr.mxu0 0.0
  %390 = vmatpush2.msra.mxu0 0.0
  %391 = vmatprep.subr.mxu0 0.0
  %392 = vmatpush2.msra.mxu0 0.0
  %393 = vmatprep.subr.mxu0 0.0
  %394 = vmatpush2.msra.mxu0 0.0
  %395 = vmatprep.subr.mxu0 0.0
  %396 = vmatpush2.msra.mxu0 0.0
  %397 = vmatprep.subr.mxu0 0.0
  %398 = vmatpush2.msra.mxu0 0.0
  %399 = vmatprep.subr.mxu0 0.0
  %400 = vmatpush2.msra.mxu0 0.0
  %401 = vmatprep.subr.mxu0 0.0
  %402 = vmatpush2.msra.mxu0 0.0
  %403 = vmatprep.subr.mxu0 0.0
  %404 = vmatpush2.msra.mxu0 0.0
  %405 = vmatprep.mubr.f32.mxu0 0.0
  %406 = vmatmul.mubr.f32.gmra.mxu0 %v324
  %v407 = vpop.f32.mrf.mxu0
  %v408 = vadd.f32 %v321, %v407
  %v409 = vpop.f32.mrf.mxu0
  %410 = vmatprep.mubr.f32.mxu0 0.0
  %411 = vmatmul.mubr.f32.gmra.mxu0 %v327
  %v412 = vpop.f32.mrf.mxu0
  %v413 = vadd.f32 %v321, %v412
  %v414 = vpop.f32.mrf.mxu0
  %415 = vmatprep.mubr.f32.mxu0 0.0
  %416 = vmatmul.mubr.f32.gmra.mxu0 %v330
  %v417 = vpop.f32.mrf.mxu0
  %v418 = vadd.f32 %v321, %v417
  %v419 = vpop.f32.mrf.mxu0
  %420 = vmatprep.mubr.f32.mxu0 0.0
  %421 = vmatmul.mubr.f32.gmra.mxu0 %v333
  %v422 = vpop.f32.mrf.mxu0
  %v423 = vadd.f32 %v321, %v422
  %v424 = vpop.f32.mrf.mxu0
  %425 = vmatprep.mubr.f32.mxu0 0.0
  %426 = vmatmul.mubr.f32.gmra.mxu0 %v336
  %v427 = vpop.f32.mrf.mxu0
  %v428 = vadd.f32 %v321, %v427
  %v429 = vpop.f32.mrf.mxu0
  %430 = vmatprep.mubr.f32.mxu0 0.0
  %431 = vmatmul.mubr.f32.gmra.mxu0 %v339
  %v432 = vpop.f32.mrf.mxu0
  %v433 = vadd.f32 %v321, %v432
  %v434 = vpop.f32.mrf.mxu0
  %435 = vdwg.mxu0
  %439 = vrot.lane.b32.xlu0 %v408, 96
  %v440 = vpop.permute.xlu0 %439
  %441 = vrot.lane.b32.xlu0 %v413, 96
  %v442 = vpop.permute.xlu0 %441
  %443 = vrot.lane.b32.xlu0 %v418, 96
  %v444 = vpop.permute.xlu0 %443
  %v445 = vsel %vm322, %v408, 0
  %v447 = vsel %vm322, %v413, 0
  %v449 = vsel %vm322, %v418, 0
  %v451 = vsel %vm322, %v440, 0
  %v453 = vsel %vm322, %v442, 0
  %v455 = vsel %vm322, %v444, 0
  %457 = vmatprep.subr.mxu0 0.0
  %458 = vmatpush1.xpose.msra.mxu0 0.0
  %459 = vmatprep.subr.mxu0 0.0
  %460 = vmatpush1.xpose.msra.mxu0 0.0
  %461 = vmatprep.subr.mxu0 0.0
  %462 = vmatpush1.xpose.msra.mxu0 0.0
  %463 = vmatprep.subr.mxu0 0.0
  %464 = vmatpush1.xpose.msra.mxu0 0.0
  %465 = vmatprep.subr.mxu0 0.0
  %466 = vmatpush1.xpose.msra.mxu0 0.0
  %467 = vmatprep.subr.mxu0 0.0
  %468 = vmatpush1.xpose.msra.mxu0 0.0
  %469 = vmatprep.subr.mxu0 0.0
  %470 = vmatpush1.xpose.msra.mxu0 0.0
  %471 = vmatprep.subr.mxu0 0.0
  %472 = vmatpush1.xpose.msra.mxu0 0.0
  %473 = vmatprep.subr.mxu0 0.0
  %474 = vmatpush1.xpose.msra.mxu0 0.0
  %475 = vmatprep.subr.mxu0 0.0
  %476 = vmatpush1.xpose.msra.mxu0 0.0
  %477 = vmatprep.subr.mxu0 0.0
  %478 = vmatpush1.xpose.msra.mxu0 0.0
  %479 = vmatprep.subr.mxu0 0.0
  %480 = vmatpush1.xpose.msra.mxu0 0.0
  %481 = vmatprep.subr.mxu0 0.0
  %482 = vmatpush1.xpose.msra.mxu0 0.0
  %483 = vmatprep.subr.mxu0 0.0
  %484 = vmatpush1.xpose.msra.mxu0 %v455
  %485 = vmatprep.subr.mxu0 0.0
  %486 = vmatpush1.xpose.msra.mxu0 %v453
  %487 = vmatprep.subr.mxu0 0.0
  %488 = vmatpush1.xpose.msra.mxu0 %v451
  %489 = vmatprep.subr.mxu0 0.0
  %490 = vmatpush2.xpose.msra.mxu0 0.0
  %491 = vmatprep.subr.mxu0 0.0
  %492 = vmatpush2.xpose.msra.mxu0 0.0
  %493 = vmatprep.subr.mxu0 0.0
  %494 = vmatpush2.xpose.msra.mxu0 0.0
  %495 = vmatprep.subr.mxu0 0.0
  %496 = vmatpush2.xpose.msra.mxu0 0.0
  %497 = vmatprep.subr.mxu0 0.0
  %498 = vmatpush2.xpose.msra.mxu0 0.0
  %499 = vmatprep.subr.mxu0 0.0
  %500 = vmatpush2.xpose.msra.mxu0 0.0
  %501 = vmatprep.subr.mxu0 0.0
  %502 = vmatpush2.xpose.msra.mxu0 0.0
  %503 = vmatprep.subr.mxu0 0.0
  %504 = vmatpush2.xpose.msra.mxu0 0.0
  %505 = vmatprep.subr.mxu0 0.0
  %506 = vmatpush2.xpose.msra.mxu0 0.0
  %507 = vmatprep.subr.mxu0 0.0
  %508 = vmatpush2.xpose.msra.mxu0 0.0
  %509 = vmatprep.subr.mxu0 0.0
  %510 = vmatpush2.xpose.msra.mxu0 0.0
  %511 = vmatprep.subr.mxu0 0.0
  %512 = vmatpush2.xpose.msra.mxu0 0.0
  %513 = vmatprep.subr.mxu0 0.0
  %514 = vmatpush2.xpose.msra.mxu0 0.0
  %515 = vmatprep.subr.mxu0 0.0
  %516 = vmatpush2.xpose.msra.mxu0 0.0
  %517 = vmatprep.subr.mxu0 0.0
  %518 = vmatpush2.xpose.msra.mxu0 0.0
  %519 = vmatprep.subr.mxu0 0.0
  %520 = vmatpush2.xpose.msra.mxu0 0.0
  %521 = vmatprep.mubr.f32.mxu0 0.0
  %522 = vmatmul.mubr.f32.gmra.mxu0 %v445
  %v523 = vpop.f32.mrf.mxu0
  %v524 = vadd.f32 0.0, %v523
  %v525 = vpop.f32.mrf.mxu0
  %526 = vmatprep.mubr.f32.mxu0 0.0
  %527 = vmatmul.mubr.f32.gmra.mxu0 %v447
  %v528 = vpop.f32.mrf.mxu0
  %v529 = vadd.f32 0.0, %v528
  %v530 = vpop.f32.mrf.mxu0
  %531 = vmatprep.mubr.f32.mxu0 0.0
  %532 = vmatmul.mubr.f32.gmra.mxu0 %v449
  %v533 = vpop.f32.mrf.mxu0
  %v534 = vadd.f32 0.0, %v533
  %v535 = vpop.f32.mrf.mxu0
  %536 = vdwg.mxu0
  %540 = vrot.lane.b32.xlu0 %v423, 96
  %v541 = vpop.permute.xlu0 %540
  %542 = vrot.lane.b32.xlu0 %v428, 96
  %v543 = vpop.permute.xlu0 %542
  %544 = vrot.lane.b32.xlu0 %v433, 96
  %v545 = vpop.permute.xlu0 %544
  %v546 = vsel %vm322, %v423, 0
  %v548 = vsel %vm322, %v428, 0
  %v550 = vsel %vm322, %v433, 0
  %v552 = vsel %vm322, %v541, 0
  %v554 = vsel %vm322, %v543, 0
  %v556 = vsel %vm322, %v545, 0
  %558 = vmatprep.subr.mxu0 0.0
  %559 = vmatpush1.xpose.msra.mxu0 0.0
  %560 = vmatprep.subr.mxu0 0.0
  %561 = vmatpush1.xpose.msra.mxu0 0.0
  %562 = vmatprep.subr.mxu0 0.0
  %563 = vmatpush1.xpose.msra.mxu0 0.0
  %564 = vmatprep.subr.mxu0 0.0
  %565 = vmatpush1.xpose.msra.mxu0 0.0
  %566 = vmatprep.subr.mxu0 0.0
  %567 = vmatpush1.xpose.msra.mxu0 0.0
  %568 = vmatprep.subr.mxu0 0.0
  %569 = vmatpush1.xpose.msra.mxu0 0.0
  %570 = vmatprep.subr.mxu0 0.0
  %571 = vmatpush1.xpose.msra.mxu0 0.0
  %572 = vmatprep.subr.mxu0 0.0
  %573 = vmatpush1.xpose.msra.mxu0 0.0
  %574 = vmatprep.subr.mxu0 0.0
  %575 = vmatpush1.xpose.msra.mxu0 0.0
  %576 = vmatprep.subr.mxu0 0.0
  %577 = vmatpush1.xpose.msra.mxu0 0.0
  %578 = vmatprep.subr.mxu0 0.0
  %579 = vmatpush1.xpose.msra.mxu0 0.0
  %580 = vmatprep.subr.mxu0 0.0
  %581 = vmatpush1.xpose.msra.mxu0 0.0
  %582 = vmatprep.subr.mxu0 0.0
  %583 = vmatpush1.xpose.msra.mxu0 0.0
  %584 = vmatprep.subr.mxu0 0.0
  %585 = vmatpush1.xpose.msra.mxu0 %v556
  %586 = vmatprep.subr.mxu0 0.0
  %587 = vmatpush1.xpose.msra.mxu0 %v554
  %588 = vmatprep.subr.mxu0 0.0
  %589 = vmatpush1.xpose.msra.mxu0 %v552
  %590 = vmatprep.subr.mxu0 0.0
  %591 = vmatpush2.xpose.msra.mxu0 0.0
  %592 = vmatprep.subr.mxu0 0.0
  %593 = vmatpush2.xpose.msra.mxu0 0.0
  %594 = vmatprep.subr.mxu0 0.0
  %595 = vmatpush2.xpose.msra.mxu0 0.0
  %596 = vmatprep.subr.mxu0 0.0
  %597 = vmatpush2.xpose.msra.mxu0 0.0
  %598 = vmatprep.subr.mxu0 0.0
  %599 = vmatpush2.xpose.msra.mxu0 0.0
  %600 = vmatprep.subr.mxu0 0.0
  %601 = vmatpush2.xpose.msra.mxu0 0.0
  %602 = vmatprep.subr.mxu0 0.0
  %603 = vmatpush2.xpose.msra.mxu0 0.0
  %604 = vmatprep.subr.mxu0 0.0
  %605 = vmatpush2.xpose.msra.mxu0 0.0
  %606 = vmatprep.subr.mxu0 0.0
  %607 = vmatpush2.xpose.msra.mxu0 0.0
  %608 = vmatprep.subr.mxu0 0.0
  %609 = vmatpush2.xpose.msra.mxu0 0.0
  %610 = vmatprep.subr.mxu0 0.0
  %611 = vmatpush2.xpose.msra.mxu0 0.0
  %612 = vmatprep.subr.mxu0 0.0
  %613 = vmatpush2.xpose.msra.mxu0 0.0
  %614 = vmatprep.subr.mxu0 0.0
  %615 = vmatpush2.xpose.msra.mxu0 0.0
  %616 = vmatprep.subr.mxu0 0.0
  %617 = vmatpush2.xpose.msra.mxu0 0.0
  %618 = vmatprep.subr.mxu0 0.0
  %619 = vmatpush2.xpose.msra.mxu0 0.0
  %620 = vmatprep.subr.mxu0 0.0
  %621 = vmatpush2.xpose.msra.mxu0 0.0
  %622 = vmatprep.mubr.f32.mxu0 0.0
  %623 = vmatmul.mubr.f32.gmra.mxu0 %v546
  %v624 = vpop.f32.mrf.mxu0
  %v625 = vadd.f32 0.0, %v624
  %v626 = vpop.f32.mrf.mxu0
  %627 = vmatprep.mubr.f32.mxu0 0.0
  %628 = vmatmul.mubr.f32.gmra.mxu0 %v548
  %v629 = vpop.f32.mrf.mxu0
  %v630 = vadd.f32 0.0, %v629
  %v631 = vpop.f32.mrf.mxu0
  %632 = vmatprep.mubr.f32.mxu0 0.0
  %633 = vmatmul.mubr.f32.gmra.mxu0 %v550
  %v634 = vpop.f32.mrf.mxu0
  %v635 = vadd.f32 0.0, %v634
  %v636 = vpop.f32.mrf.mxu0
  %637 = vdwg.mxu0
  %v638 = vmul.f32 %v524, 0.17677669
  %v639 = vmul.f32 %v529, 0.17677669
  %v640 = vmul.f32 %v534, 0.17677669
  %v641 = vmul.f32 %v625, 0.17677669
  %v642 = vmul.f32 %v630, 0.17677669
  %v643 = vmul.f32 %v635, 0.17677669
  %vm644 = vcmask 195584
  %v645 = vsel %vm644, %v638, -inf
  %646 = vmax.xlane.f32.xlu0 %v645
  %v647 = vpop.xlane.xlu0 %646
  %v648 = vsel %vm644, %v639, -inf
  %649 = vmax.xlane.f32.xlu0 %v648
  %v650 = vpop.xlane.xlu0 %649
  %v651 = vsel %vm644, %v640, -inf
  %652 = vmax.xlane.f32.xlu0 %v651
  %v653 = vpop.xlane.xlu0 %652
  %v654 = vsel %vm644, %v641, -inf
  %655 = vmax.xlane.f32.xlu0 %v654
  %v656 = vpop.xlane.xlu0 %655
  %v657 = vsel %vm644, %v642, -inf
  %658 = vmax.xlane.f32.xlu0 %v657
  %v659 = vpop.xlane.xlu0 %658
  %v660 = vsel %vm644, %v643, -inf
  %661 = vmax.xlane.f32.xlu0 %v660
  %v662 = vpop.xlane.xlu0 %661
  %v663 = vsub.f32 %v638, %v647
  %v664 = vsub.f32 %v639, %v650
  %v665 = vsub.f32 %v640, %v653
  %v666 = vsub.f32 %v641, %v656
  %v667 = vsub.f32 %v642, %v659
  %v668 = vsub.f32 %v643, %v662
  %v669 = vmul.f32 %v663, 1.442695
  %v670 = vpow.pop %v669
  %v671 = vmul.f32 %v664, 1.442695
  %v672 = vpow.pop %v671
  %v673 = vmul.f32 %v665, 1.442695
  %v674 = vpow.pop %v673
  %v675 = vmul.f32 %v666, 1.442695
  %v676 = vpow.pop %v675
  %v677 = vmul.f32 %v667, 1.442695
  %v678 = vpow.pop %v677
  %v679 = vmul.f32 %v668, 1.442695
  %v680 = vpow.pop %v679
  %v681 = vsel %vm644, %v670, 0.0
  %682 = vadd.xlane.f32.xlu0 %v681
  %v683 = vpop.xlane.xlu0 %682
  %v684 = vsel %vm644, %v672, 0.0
  %685 = vadd.xlane.f32.xlu0 %v684
  %v686 = vpop.xlane.xlu0 %685
  %v687 = vsel %vm644, %v674, 0.0
  %688 = vadd.xlane.f32.xlu0 %v687
  %v689 = vpop.xlane.xlu0 %688
  %v690 = vsel %vm644, %v676, 0.0
  %691 = vadd.xlane.f32.xlu0 %v690
  %v692 = vpop.xlane.xlu0 %691
  %v693 = vsel %vm644, %v678, 0.0
  %694 = vadd.xlane.f32.xlu0 %v693
  %v695 = vpop.xlane.xlu0 %694
  %v696 = vsel %vm644, %v680, 0.0
  %697 = vadd.xlane.f32.xlu0 %v696
  %v698 = vpop.xlane.xlu0 %697
  %v699 = vrcp.pop %v683
  %v700 = vrcp.pop %v686
  %v701 = vrcp.pop %v689
  %v702 = vrcp.pop %v692
  %v703 = vrcp.pop %v695
  %v704 = vrcp.pop %v698
  %v705 = vmul.f32 %v670, %v699
  %v706 = vmul.f32 %v672, %v700
  %v707 = vmul.f32 %v674, %v701
  %v708 = vmul.f32 %v676, %v702
  %v709 = vmul.f32 %v678, %v703
  %v710 = vmul.f32 %v680, %v704
  %711 = vrot.lane.b32.xlu0 %v408, 64
  %v712 = vpop.permute.xlu0 %711
  %713 = vrot.lane.b32.xlu0 %v413, 64
  %v714 = vpop.permute.xlu0 %713
  %715 = vrot.lane.b32.xlu0 %v418, 64
  %v716 = vpop.permute.xlu0 %715
  %v721 = vsel %vm644, %v705, 0
  %v724 = vsel %vm644, %v706, 0
  %v727 = vsel %vm644, %v707, 0
  %729 = vmatprep.subr.mxu0 0.0
  %730 = vmatpush1.msra.mxu0 0.0
  %731 = vmatprep.subr.mxu0 0.0
  %732 = vmatpush1.msra.mxu0 0.0
  %733 = vmatprep.subr.mxu0 0.0
  %734 = vmatpush1.msra.mxu0 0.0
  %735 = vmatprep.subr.mxu0 0.0
  %736 = vmatpush1.msra.mxu0 0.0
  %737 = vmatprep.subr.mxu0 0.0
  %738 = vmatpush1.msra.mxu0 0.0
  %739 = vmatprep.subr.mxu0 0.0
  %740 = vmatpush1.msra.mxu0 0.0
  %741 = vmatprep.subr.mxu0 0.0
  %742 = vmatpush1.msra.mxu0 0.0
  %743 = vmatprep.subr.mxu0 0.0
  %744 = vmatpush1.msra.mxu0 0.0
  %745 = vmatprep.subr.mxu0 0.0
  %746 = vmatpush1.msra.mxu0 0.0
  %747 = vmatprep.subr.mxu0 0.0
  %748 = vmatpush1.msra.mxu0 0.0
  %749 = vmatprep.subr.mxu0 0.0
  %750 = vmatpush1.msra.mxu0 0.0
  %751 = vmatprep.subr.mxu0 0.0
  %752 = vmatpush1.msra.mxu0 0.0
  %753 = vmatprep.subr.mxu0 0.0
  %754 = vmatpush1.msra.mxu0 0.0
  %755 = vmatprep.subr.mxu0 0.0
  %756 = vmatpush1.msra.mxu0 %v716
  %757 = vmatprep.subr.mxu0 0.0
  %758 = vmatpush1.msra.mxu0 %v714
  %759 = vmatprep.subr.mxu0 0.0
  %760 = vmatpush1.msra.mxu0 %v712
  %761 = vmatprep.subr.mxu0 0.0
  %762 = vmatpush2.msra.mxu0 0.0
  %763 = vmatprep.subr.mxu0 0.0
  %764 = vmatpush2.msra.mxu0 0.0
  %765 = vmatprep.subr.mxu0 0.0
  %766 = vmatpush2.msra.mxu0 0.0
  %767 = vmatprep.subr.mxu0 0.0
  %768 = vmatpush2.msra.mxu0 0.0
  %769 = vmatprep.subr.mxu0 0.0
  %770 = vmatpush2.msra.mxu0 0.0
  %771 = vmatprep.subr.mxu0 0.0
  %772 = vmatpush2.msra.mxu0 0.0
  %773 = vmatprep.subr.mxu0 0.0
  %774 = vmatpush2.msra.mxu0 0.0
  %775 = vmatprep.subr.mxu0 0.0
  %776 = vmatpush2.msra.mxu0 0.0
  %777 = vmatprep.subr.mxu0 0.0
  %778 = vmatpush2.msra.mxu0 0.0
  %779 = vmatprep.subr.mxu0 0.0
  %780 = vmatpush2.msra.mxu0 0.0
  %781 = vmatprep.subr.mxu0 0.0
  %782 = vmatpush2.msra.mxu0 0.0
  %783 = vmatprep.subr.mxu0 0.0
  %784 = vmatpush2.msra.mxu0 0.0
  %785 = vmatprep.subr.mxu0 0.0
  %786 = vmatpush2.msra.mxu0 0.0
  %787 = vmatprep.subr.mxu0 0.0
  %788 = vmatpush2.msra.mxu0 0.0
  %789 = vmatprep.subr.mxu0 0.0
  %790 = vmatpush2.msra.mxu0 0.0
  %791 = vmatprep.subr.mxu0 0.0
  %792 = vmatpush2.msra.mxu0 0.0
  %793 = vmatprep.mubr.f32.mxu0 0.0
  %794 = vmatmul.mubr.f32.gmra.mxu0 %v721
  %v795 = vpop.f32.mrf.mxu0
  %v796 = vadd.f32 0.0, %v795
  %v797 = vpop.f32.mrf.mxu0
  %798 = vmatprep.mubr.f32.mxu0 0.0
  %799 = vmatmul.mubr.f32.gmra.mxu0 %v724
  %v800 = vpop.f32.mrf.mxu0
  %v801 = vadd.f32 0.0, %v800
  %v802 = vpop.f32.mrf.mxu0
  %803 = vmatprep.mubr.f32.mxu0 0.0
  %804 = vmatmul.mubr.f32.gmra.mxu0 %v727
  %v805 = vpop.f32.mrf.mxu0
  %v806 = vadd.f32 0.0, %v805
  %v807 = vpop.f32.mrf.mxu0
  %808 = vdwg.mxu0
  %809 = vrot.lane.b32.xlu0 %v423, 64
  %v810 = vpop.permute.xlu0 %809
  %811 = vrot.lane.b32.xlu0 %v428, 64
  %v812 = vpop.permute.xlu0 %811
  %813 = vrot.lane.b32.xlu0 %v433, 64
  %v814 = vpop.permute.xlu0 %813
  %v819 = vsel %vm644, %v708, 0
  %v822 = vsel %vm644, %v709, 0
  %v825 = vsel %vm644, %v710, 0
  %827 = vmatprep.subr.mxu0 0.0
  %828 = vmatpush1.msra.mxu0 0.0
  %829 = vmatprep.subr.mxu0 0.0
  %830 = vmatpush1.msra.mxu0 0.0
  %831 = vmatprep.subr.mxu0 0.0
  %832 = vmatpush1.msra.mxu0 0.0
  %833 = vmatprep.subr.mxu0 0.0
  %834 = vmatpush1.msra.mxu0 0.0
  %835 = vmatprep.subr.mxu0 0.0
  %836 = vmatpush1.msra.mxu0 0.0
  %837 = vmatprep.subr.mxu0 0.0
  %838 = vmatpush1.msra.mxu0 0.0
  %839 = vmatprep.subr.mxu0 0.0
  %840 = vmatpush1.msra.mxu0 0.0
  %841 = vmatprep.subr.mxu0 0.0
  %842 = vmatpush1.msra.mxu0 0.0
  %843 = vmatprep.subr.mxu0 0.0
  %844 = vmatpush1.msra.mxu0 0.0
  %845 = vmatprep.subr.mxu0 0.0
  %846 = vmatpush1.msra.mxu0 0.0
  %847 = vmatprep.subr.mxu0 0.0
  %848 = vmatpush1.msra.mxu0 0.0
  %849 = vmatprep.subr.mxu0 0.0
  %850 = vmatpush1.msra.mxu0 0.0
  %851 = vmatprep.subr.mxu0 0.0
  %852 = vmatpush1.msra.mxu0 0.0
  %853 = vmatprep.subr.mxu0 0.0
  %854 = vmatpush1.msra.mxu0 %v814
  %855 = vmatprep.subr.mxu0 0.0
  %856 = vmatpush1.msra.mxu0 %v812
  %857 = vmatprep.subr.mxu0 0.0
  %858 = vmatpush1.msra.mxu0 %v810
  %859 = vmatprep.subr.mxu0 0.0
  %860 = vmatpush2.msra.mxu0 0.0
  %861 = vmatprep.subr.mxu0 0.0
  %862 = vmatpush2.msra.mxu0 0.0
  %863 = vmatprep.subr.mxu0 0.0
  %864 = vmatpush2.msra.mxu0 0.0
  %865 = vmatprep.subr.mxu0 0.0
  %866 = vmatpush2.msra.mxu0 0.0
  %867 = vmatprep.subr.mxu0 0.0
  %868 = vmatpush2.msra.mxu0 0.0
  %869 = vmatprep.subr.mxu0 0.0
  %870 = vmatpush2.msra.mxu0 0.0
  %871 = vmatprep.subr.mxu0 0.0
  %872 = vmatpush2.msra.mxu0 0.0
  %873 = vmatprep.subr.mxu0 0.0
  %874 = vmatpush2.msra.mxu0 0.0
  %875 = vmatprep.subr.mxu0 0.0
  %876 = vmatpush2.msra.mxu0 0.0
  %877 = vmatprep.subr.mxu0 0.0
  %878 = vmatpush2.msra.mxu0 0.0
  %879 = vmatprep.subr.mxu0 0.0
  %880 = vmatpush2.msra.mxu0 0.0
  %881 = vmatprep.subr.mxu0 0.0
  %882 = vmatpush2.msra.mxu0 0.0
  %883 = vmatprep.subr.mxu0 0.0
  %884 = vmatpush2.msra.mxu0 0.0
  %885 = vmatprep.subr.mxu0 0.0
  %886 = vmatpush2.msra.mxu0 0.0
  %887 = vmatprep.subr.mxu0 0.0
  %888 = vmatpush2.msra.mxu0 0.0
  %889 = vmatprep.subr.mxu0 0.0
  %890 = vmatpush2.msra.mxu0 0.0
  %891 = vmatprep.mubr.f32.mxu0 0.0
  %892 = vmatmul.mubr.f32.gmra.mxu0 %v819
  %v893 = vpop.f32.mrf.mxu0
  %v894 = vadd.f32 0.0, %v893
  %v895 = vpop.f32.mrf.mxu0
  %896 = vmatprep.mubr.f32.mxu0 0.0
  %897 = vmatmul.mubr.f32.gmra.mxu0 %v822
  %v898 = vpop.f32.mrf.mxu0
  %v899 = vadd.f32 0.0, %v898
  %v900 = vpop.f32.mrf.mxu0
  %901 = vmatprep.mubr.f32.mxu0 0.0
  %902 = vmatmul.mubr.f32.gmra.mxu0 %v825
  %v903 = vpop.f32.mrf.mxu0
  %v904 = vadd.f32 0.0, %v903
  %v905 = vpop.f32.mrf.mxu0
  %906 = vdwg.mxu0
  %v907 = vld [vmem:[%s6 + $0x1] sm:$0x1]
  %v908 = vlaneseq
  %v909 = vshrl.u32 %v908, 7
  %v910 = vsub.s32 0, %v909
  %v911 = vrot.slane %v907, %v910
  %916 = vrot.lane.b32.xlu0 %v313, 32
  %v917 = vpop.permute.xlu0 %916
  %918 = vrot.lane.b32.xlu0 %v314, 32
  %v919 = vpop.permute.xlu0 %918
  %920 = vrot.lane.b32.xlu0 %v315, 32
  %v921 = vpop.permute.xlu0 %920
  %922 = vrot.lane.b32.xlu0 %v316, 32
  %v923 = vpop.permute.xlu0 %922
  %v929 = vsel %vm322, %v796, 0
  %v932 = vsel %vm322, %v801, 0
  %v935 = vsel %vm322, %v806, 0
  %v938 = vsel %vm322, %v894, 0
  %v941 = vsel %vm322, %v899, 0
  %v944 = vsel %vm322, %v904, 0
  %946 = vmatprep.subr.mxu0 0.0
  %947 = vmatpush1.msra.mxu0 0.0
  %948 = vmatprep.subr.mxu0 0.0
  %949 = vmatpush1.msra.mxu0 0.0
  %950 = vmatprep.subr.mxu0 0.0
  %951 = vmatpush1.msra.mxu0 0.0
  %952 = vmatprep.subr.mxu0 0.0
  %953 = vmatpush1.msra.mxu0 0.0
  %954 = vmatprep.subr.mxu0 0.0
  %955 = vmatpush1.msra.mxu0 0.0
  %956 = vmatprep.subr.mxu0 0.0
  %957 = vmatpush1.msra.mxu0 0.0
  %958 = vmatprep.subr.mxu0 0.0
  %959 = vmatpush1.msra.mxu0 0.0
  %960 = vmatprep.subr.mxu0 0.0
  %961 = vmatpush1.msra.mxu0 0.0
  %962 = vmatprep.subr.mxu0 0.0
  %963 = vmatpush1.msra.mxu0 0.0
  %964 = vmatprep.subr.mxu0 0.0
  %965 = vmatpush1.msra.mxu0 0.0
  %966 = vmatprep.subr.mxu0 0.0
  %967 = vmatpush1.msra.mxu0 0.0
  %968 = vmatprep.subr.mxu0 0.0
  %969 = vmatpush1.msra.mxu0 0.0
  %970 = vmatprep.subr.mxu0 0.0
  %971 = vmatpush1.msra.mxu0 %v923
  %972 = vmatprep.subr.mxu0 0.0
  %973 = vmatpush1.msra.mxu0 %v921
  %974 = vmatprep.subr.mxu0 0.0
  %975 = vmatpush1.msra.mxu0 %v919
  %976 = vmatprep.subr.mxu0 0.0
  %977 = vmatpush1.msra.mxu0 %v917
  %978 = vmatprep.subr.mxu0 0.0
  %979 = vmatpush2.msra.mxu0 0.0
  %980 = vmatprep.subr.mxu0 0.0
  %981 = vmatpush2.msra.mxu0 0.0
  %982 = vmatprep.subr.mxu0 0.0
  %983 = vmatpush2.msra.mxu0 0.0
  %984 = vmatprep.subr.mxu0 0.0
  %985 = vmatpush2.msra.mxu0 0.0
  %986 = vmatprep.subr.mxu0 0.0
  %987 = vmatpush2.msra.mxu0 0.0
  %988 = vmatprep.subr.mxu0 0.0
  %989 = vmatpush2.msra.mxu0 0.0
  %990 = vmatprep.subr.mxu0 0.0
  %991 = vmatpush2.msra.mxu0 0.0
  %992 = vmatprep.subr.mxu0 0.0
  %993 = vmatpush2.msra.mxu0 0.0
  %994 = vmatprep.subr.mxu0 0.0
  %995 = vmatpush2.msra.mxu0 0.0
  %996 = vmatprep.subr.mxu0 0.0
  %997 = vmatpush2.msra.mxu0 0.0
  %998 = vmatprep.subr.mxu0 0.0
  %999 = vmatpush2.msra.mxu0 0.0
  %1000 = vmatprep.subr.mxu0 0.0
  %1001 = vmatpush2.msra.mxu0 0.0
  %1002 = vmatprep.subr.mxu0 0.0
  %1003 = vmatpush2.msra.mxu0 0.0
  %1004 = vmatprep.subr.mxu0 0.0
  %1005 = vmatpush2.msra.mxu0 0.0
  %1006 = vmatprep.subr.mxu0 0.0
  %1007 = vmatpush2.msra.mxu0 0.0
  %1008 = vmatprep.subr.mxu0 0.0
  %1009 = vmatpush2.msra.mxu0 0.0
  %1010 = vmatprep.mubr.f32.mxu0 0.0
  %1011 = vmatmul.mubr.f32.gmra.mxu0 %v929
  %v1012 = vpop.f32.mrf.mxu0
  %v1013 = vadd.f32 %v911, %v1012
  %v1014 = vpop.f32.mrf.mxu0
  %1015 = vmatprep.mubr.f32.mxu0 0.0
  %1016 = vmatmul.mubr.f32.gmra.mxu0 %v932
  %v1017 = vpop.f32.mrf.mxu0
  %v1018 = vadd.f32 %v911, %v1017
  %v1019 = vpop.f32.mrf.mxu0
  %1020 = vmatprep.mubr.f32.mxu0 0.0
  %1021 = vmatmul.mubr.f32.gmra.mxu0 %v935
  %v1022 = vpop.f32.mrf.mxu0
  %v1023 = vadd.f32 %v911, %v1022
  %v1024 = vpop.f32.mrf.mxu0
  %1025 = vmatprep.mubr.f32.mxu0 0.0
  %1026 = vmatmul.mubr.f32.gmra.mxu0 %v938
  %v1027 = vpop.f32.mrf.mxu0
  %v1028 = vadd.f32 %v911, %v1027
  %v1029 = vpop.f32.mrf.mxu0
  %1030 = vmatprep.mubr.f32.mxu0 0.0
  %1031 = vmatmul.mubr.f32.gmra.mxu0 %v941
  %v1032 = vpop.f32.mrf.mxu0
  %v1033 = vadd.f32 %v911, %v1032
  %v1034 = vpop.f32.mrf.mxu0
  %1035 = vmatprep.mubr.f32.mxu0 0.0
  %1036 = vmatmul.mubr.f32.gmra.mxu0 %v944
  %v1037 = vpop.f32.mrf.mxu0
  %v1038 = vadd.f32 %v911, %v1037
  %v1039 = vpop.f32.mrf.mxu0
  %1040 = vdwg.mxu0
  %v1041 = vadd.f32 %v285, %v1013
  %v1042 = vadd.f32 %v290, %v1018
  %v1043 = vadd.f32 %v295, %v1023
  %v1044 = vadd.f32 %v300, %v1028
  %v1045 = vadd.f32 %v305, %v1033
  %v1046 = vadd.f32 %v310, %v1038
  %v1047 = vld [vmem:[%s6 + $0x2] sm:$0x1]
  %v1048 = vld [vmem:[%s6 + $0x3] sm:$0x1]
  %v1049 = vsel %vm322, %v1041, 0.0
  %1050 = vadd.xlane.f32.xlu0 %v1049
  %v1051 = vpop.xlane.xlu0 %1050
  %v1052 = vsel %vm322, %v1042, 0.0
  %1053 = vadd.xlane.f32.xlu0 %v1052
  %v1054 = vpop.xlane.xlu0 %1053
  %v1055 = vsel %vm322, %v1043, 0.0
  %1056 = vadd.xlane.f32.xlu0 %v1055
  %v1057 = vpop.xlane.xlu0 %1056
  %v1058 = vsel %vm322, %v1044, 0.0
  %1059 = vadd.xlane.f32.xlu0 %v1058
  %v1060 = vpop.xlane.xlu0 %1059
  %v1061 = vsel %vm322, %v1045, 0.0
  %1062 = vadd.xlane.f32.xlu0 %v1061
  %v1063 = vpop.xlane.xlu0 %1062
  %v1064 = vsel %vm322, %v1046, 0.0
  %1065 = vadd.xlane.f32.xlu0 %v1064
  %v1066 = vpop.xlane.xlu0 %1065
  %v1067 = vrcp.pop 32.0
  %v1068 = vmul.f32 %v1051, %v1067
  %v1069 = vmul.f32 %v1054, %v1067
  %v1070 = vmul.f32 %v1057, %v1067
  %v1071 = vmul.f32 %v1060, %v1067
  %v1072 = vmul.f32 %v1063, %v1067
  %v1073 = vmul.f32 %v1066, %v1067
  %v1074 = vsub.f32 %v1041, %v1068
  %v1075 = vsub.f32 %v1042, %v1069
  %v1076 = vsub.f32 %v1043, %v1070
  %v1077 = vsub.f32 %v1044, %v1071
  %v1078 = vsub.f32 %v1045, %v1072
  %v1079 = vsub.f32 %v1046, %v1073
  %v1080 = vmul.f32 %v1074, %v1074
  %v1081 = vmul.f32 %v1075, %v1075
  %v1082 = vmul.f32 %v1076, %v1076
  %v1083 = vmul.f32 %v1077, %v1077
  %v1084 = vmul.f32 %v1078, %v1078
  %v1085 = vmul.f32 %v1079, %v1079
  %v1086 = vsel %vm322, %v1080, 0.0
  %1087 = vadd.xlane.f32.xlu0 %v1086
  %v1088 = vpop.xlane.xlu0 %1087
  %v1089 = vsel %vm322, %v1081, 0.0
  %1090 = vadd.xlane.f32.xlu0 %v1089
  %v1091 = vpop.xlane.xlu0 %1090
  %v1092 = vsel %vm322, %v1082, 0.0
  %1093 = vadd.xlane.f32.xlu0 %v1092
  %v1094 = vpop.xlane.xlu0 %1093
  %v1095 = vsel %vm322, %v1083, 0.0
  %1096 = vadd.xlane.f32.xlu0 %v1095
  %v1097 = vpop.xlane.xlu0 %1096
  %v1098 = vsel %vm322, %v1084, 0.0
  %1099 = vadd.xlane.f32.xlu0 %v1098
  %v1100 = vpop.xlane.xlu0 %1099
  %v1101 = vsel %vm322, %v1085, 0.0
  %1102 = vadd.xlane.f32.xlu0 %v1101
  %v1103 = vpop.xlane.xlu0 %1102
  %v1104 = vmul.f32 %v1088, %v1067
  %v1105 = vmul.f32 %v1091, %v1067
  %v1106 = vmul.f32 %v1094, %v1067
  %v1107 = vmul.f32 %v1097, %v1067
  %v1108 = vmul.f32 %v1100, %v1067
  %v1109 = vmul.f32 %v1103, %v1067
  %v1110 = vadd.f32 %v1104, 1e-05
  %v1111 = vadd.f32 %v1105, 1e-05
  %v1112 = vadd.f32 %v1106, 1e-05
  %v1113 = vadd.f32 %v1107, 1e-05
  %v1114 = vadd.f32 %v1108, 1e-05
  %v1115 = vadd.f32 %v1109, 1e-05
  %v1116 = vrsqrt.pop %v1110
  %v1117 = vrsqrt.pop %v1111
  %v1118 = vrsqrt.pop %v1112
  %v1119 = vrsqrt.pop %v1113
  %v1120 = vrsqrt.pop %v1114
  %v1121 = vrsqrt.pop %v1115
  %v1122 = vmul.f32 %v1074, %v1116
  %v1123 = vmul.f32 %v1075, %v1117
  %v1124 = vmul.f32 %v1076, %v1118
  %v1125 = vmul.f32 %v1077, %v1119
  %v1126 = vmul.f32 %v1078, %v1120
  %v1127 = vmul.f32 %v1079, %v1121
  %v1128 = vlaneseq
  %v1129 = vshrl.u32 %v1128, 7
  %v1130 = vsub.s32 0, %v1129
  %v1131 = vrot.slane %v1047, %v1130
  %v1132 = vmul.f32 %v1122, %v1131
  %v1133 = vmul.f32 %v1123, %v1131
  %v1134 = vmul.f32 %v1124, %v1131
  %v1135 = vmul.f32 %v1125, %v1131
  %v1136 = vmul.f32 %v1126, %v1131
  %v1137 = vmul.f32 %v1127, %v1131
  %v1138 = vlaneseq
  %v1139 = vshrl.u32 %v1138, 7
  %v1140 = vsub.s32 0, %v1139
  %v1141 = vrot.slane %v1048, %v1140
  %v1142 = vadd.f32 %v1132, %v1141
  %v1143 = vadd.f32 %v1133, %v1141
  %v1144 = vadd.f32 %v1134, %v1141
  %v1145 = vadd.f32 %v1135, %v1141
  %v1146 = vadd.f32 %v1136, %v1141
  %v1147 = vadd.f32 %v1137, %v1141
  %v1148 = vld [vmem:[%s4] sm:$0xff]
  %v1149 = vld [vmem:[%s4 + $0x8] sm:$0xff]
  %v1150 = vld [vmem:[%s4 + $0x10] sm:$0xff]
  %v1151 = vld [vmem:[%s4 + $0x18] sm:$0xff]
  %v1152 = vld [vmem:[%s6 + $0x4] sm:$0x1]
  %v1153 = vlaneseq
  %v1154 = vshrl.u32 %v1153, 7
  %v1155 = vsub.s32 0, %v1154
  %v1156 = vrot.slane %v1152, %v1155
  %v1158 = vsel %vm322, %v1142, 0
  %v1161 = vsel %vm322, %v1143, 0
  %v1164 = vsel %vm322, %v1144, 0
  %v1167 = vsel %vm322, %v1145, 0
  %v1170 = vsel %vm322, %v1146, 0
  %v1173 = vsel %vm322, %v1147, 0
  %1175 = vmatprep.subr.mxu0 0.0
  %1176 = vmatpush1.msra.mxu0 0.0
  %1177 = vmatprep.subr.mxu0 0.0
  %1178 = vmatpush1.msra.mxu0 0.0
  %1179 = vmatprep.subr.mxu0 0.0
  %1180 = vmatpush1.msra.mxu0 0.0
  %1181 = vmatprep.subr.mxu0 0.0
  %1182 = vmatpush1.msra.mxu0 0.0
  %1183 = vmatprep.subr.mxu0 0.0
  %1184 = vmatpush1.msra.mxu0 0.0
  %1185 = vmatprep.subr.mxu0 0.0
  %1186 = vmatpush1.msra.mxu0 0.0
  %1187 = vmatprep.subr.mxu0 0.0
  %1188 = vmatpush1.msra.mxu0 0.0
  %1189 = vmatprep.subr.mxu0 0.0
  %1190 = vmatpush1.msra.mxu0 0.0
  %1191 = vmatprep.subr.mxu0 0.0
  %1192 = vmatpush1.msra.mxu0 0.0
  %1193 = vmatprep.subr.mxu0 0.0
  %1194 = vmatpush1.msra.mxu0 0.0
  %1195 = vmatprep.subr.mxu0 0.0
  %1196 = vmatpush1.msra.mxu0 0.0
  %1197 = vmatprep.subr.mxu0 0.0
  %1198 = vmatpush1.msra.mxu0 0.0
  %1199 = vmatprep.subr.mxu0 0.0
  %1200 = vmatpush1.msra.mxu0 %v1151
  %1201 = vmatprep.subr.mxu0 0.0
  %1202 = vmatpush1.msra.mxu0 %v1150
  %1203 = vmatprep.subr.mxu0 0.0
  %1204 = vmatpush1.msra.mxu0 %v1149
  %1205 = vmatprep.subr.mxu0 0.0
  %1206 = vmatpush1.msra.mxu0 %v1148
  %1207 = vmatprep.subr.mxu0 0.0
  %1208 = vmatpush2.msra.mxu0 0.0
  %1209 = vmatprep.subr.mxu0 0.0
  %1210 = vmatpush2.msra.mxu0 0.0
  %1211 = vmatprep.subr.mxu0 0.0
  %1212 = vmatpush2.msra.mxu0 0.0
  %1213 = vmatprep.subr.mxu0 0.0
  %1214 = vmatpush2.msra.mxu0 0.0
  %1215 = vmatprep.subr.mxu0 0.0
  %1216 = vmatpush2.msra.mxu0 0.0
  %1217 = vmatprep.subr.mxu0 0.0
  %1218 = vmatpush2.msra.mxu0 0.0
  %1219 = vmatprep.subr.mxu0 0.0
  %1220 = vmatpush2.msra.mxu0 0.0
  %1221 = vmatprep.subr.mxu0 0.0
  %1222 = vmatpush2.msra.mxu0 0.0
  %1223 = vmatprep.subr.mxu0 0.0
  %1224 = vmatpush2.msra.mxu0 0.0
  %1225 = vmatprep.subr.mxu0 0.0
  %1226 = vmatpush2.msra.mxu0 0.0
  %1227 = vmatprep.subr.mxu0 0.0
  %1228 = vmatpush2.msra.mxu0 0.0
  %1229 = vmatprep.subr.mxu0 0.0
  %1230 = vmatpush2.msra.mxu0 0.0
  %1231 = vmatprep.subr.mxu0 0.0
  %1232 = vmatpush2.msra.mxu0 0.0
  %1233 = vmatprep.subr.mxu0 0.0
  %1234 = vmatpush2.msra.mxu0 0.0
  %1235 = vmatprep.subr.mxu0 0.0
  %1236 = vmatpush2.msra.mxu0 0.0
  %1237 = vmatprep.subr.mxu0 0.0
  %1238 = vmatpush2.msra.mxu0 0.0
  %1239 = vmatprep.mubr.f32.mxu0 0.0
  %1240 = vmatmul.mubr.f32.gmra.mxu0 %v1158
  %v1241 = vpop.f32.mrf.mxu0
  %v1242 = vadd.f32 %v1156, %v1241
  %v1243 = vpop.f32.mrf.mxu0
  %1244 = vmatprep.mubr.f32.mxu0 0.0
  %1245 = vmatmul.mubr.f32.gmra.mxu0 %v1161
  %v1246 = vpop.f32.mrf.mxu0
  %v1247 = vadd.f32 %v1156, %v1246
  %v1248 = vpop.f32.mrf.mxu0
  %1249 = vmatprep.mubr.f32.mxu0 0.0
  %1250 = vmatmul.mubr.f32.gmra.mxu0 %v1164
  %v1251 = vpop.f32.mrf.mxu0
  %v1252 = vadd.f32 %v1156, %v1251
  %v1253 = vpop.f32.mrf.mxu0
  %1254 = vmatprep.mubr.f32.mxu0 0.0
  %1255 = vmatmul.mubr.f32.gmra.mxu0 %v1167
  %v1256 = vpop.f32.mrf.mxu0
  %v1257 = vadd.f32 %v1156, %v1256
  %v1258 = vpop.f32.mrf.mxu0
  %1259 = vmatprep.mubr.f32.mxu0 0.0
  %1260 = vmatmul.mubr.f32.gmra.mxu0 %v1170
  %v1261 = vpop.f32.mrf.mxu0
  %v1262 = vadd.f32 %v1156, %v1261
  %v1263 = vpop.f32.mrf.mxu0
  %1264 = vmatprep.mubr.f32.mxu0 0.0
  %1265 = vmatmul.mubr.f32.gmra.mxu0 %v1173
  %v1266 = vpop.f32.mrf.mxu0
  %v1267 = vadd.f32 %v1156, %v1266
  %v1268 = vpop.f32.mrf.mxu0
  %1269 = vdwg.mxu0
  %v1270 = vmax.f32 %v1242, 0.0
  %v1271 = vmax.f32 %v1247, 0.0
  %v1272 = vmax.f32 %v1252, 0.0
  %v1273 = vmax.f32 %v1257, 0.0
  %v1274 = vmax.f32 %v1262, 0.0
  %v1275 = vmax.f32 %v1267, 0.0
  %v1276 = vld [vmem:[%s5] sm:$0xff]
  %v1277 = vld [vmem:[%s5 + $0x8] sm:$0xff]
  %v1278 = vld [vmem:[%s5 + $0x10] sm:$0xff]
  %v1279 = vld [vmem:[%s5 + $0x18] sm:$0xff]
  %v1280 = vld [vmem:[%s5 + $0x20] sm:$0xff]
  %v1281 = vld [vmem:[%s5 + $0x28] sm:$0xff]
  %v1282 = vld [vmem:[%s5 + $0x30] sm:$0xff]
  %v1283 = vld [vmem:[%s5 + $0x38] sm:$0xff]
  %v1284 = vld [vmem:[%s6 + $0x5] sm:$0x1]
  %v1285 = vlaneseq
  %v1286 = vshrl.u32 %v1285, 7
  %v1287 = vsub.s32 0, %v1286
  %v1288 = vrot.slane %v1284, %v1287
  %vm1289 = vcmask 523264
  %v1291 = vsel %vm1289, %v1270, 0
  %v1294 = vsel %vm1289, %v1271, 0
  %v1297 = vsel %vm1289, %v1272, 0
  %v1300 = vsel %vm1289, %v1273, 0
  %v1303 = vsel %vm1289, %v1274, 0
  %v1306 = vsel %vm1289, %v1275, 0
  %1308 = vmatprep.subr.mxu0 0.0
  %1309 = vmatpush1.msra.mxu0 0.0
  %1310 = vmatprep.subr.mxu0 0.0
  %1311 = vmatpush1.msra.mxu0 0.0
  %1312 = vmatprep.subr.mxu0 0.0
  %1313 = vmatpush1.msra.mxu0 0.0
  %1314 = vmatprep.subr.mxu0 0.0
  %1315 = vmatpush1.msra.mxu0 0.0
  %1316 = vmatprep.subr.mxu0 0.0
  %1317 = vmatpush1.msra.mxu0 0.0
  %1318 = vmatprep.subr.mxu0 0.0
  %1319 = vmatpush1.msra.mxu0 0.0
  %1320 = vmatprep.subr.mxu0 0.0
  %1321 = vmatpush1.msra.mxu0 0.0
  %1322 = vmatprep.subr.mxu0 0.0
  %1323 = vmatpush1.msra.mxu0 0.0
  %1324 = vmatprep.subr.mxu0 0.0
  %1325 = vmatpush1.msra.mxu0 %v1283
  %1326 = vmatprep.subr.mxu0 0.0
  %1327 = vmatpush1.msra.mxu0 %v1282
  %1328 = vmatprep.subr.mxu0 0.0
  %1329 = vmatpush1.msra.mxu0 %v1281
  %1330 = vmatprep.subr.mxu0 0.0
  %1331 = vmatpush1.msra.mxu0 %v1280
  %1332 = vmatprep.subr.mxu0 0.0
  %1333 = vmatpush1.msra.mxu0 %v1279
  %1334 = vmatprep.subr.mxu0 0.0
  %1335 = vmatpush1.msra.mxu0 %v1278
  %1336 = vmatprep.subr.mxu0 0.0
  %1337 = vmatpush1.msra.mxu0 %v1277
  %1338 = vmatprep.subr.mxu0 0.0
  %1339 = vmatpush1.msra.mxu0 %v1276
  %1340 = vmatprep.subr.mxu0 0.0
  %1341 = vmatpush2.msra.mxu0 0.0
  %1342 = vmatprep.subr.mxu0 0.0
  %1343 = vmatpush2.msra.mxu0 0.0
  %1344 = vmatprep.subr.mxu0 0.0
  %1345 = vmatpush2.msra.mxu0 0.0
  %1346 = vmatprep.subr.mxu0 0.0
  %1347 = vmatpush2.msra.mxu0 0.0
  %1348 = vmatprep.subr.mxu0 0.0
  %1349 = vmatpush2.msra.mxu0 0.0
  %1350 = vmatprep.subr.mxu0 0.0
  %1351 = vmatpush2.msra.mxu0 0.0
  %1352 = vmatprep.subr.mxu0 0.0
  %1353 = vmatpush2.msra.mxu0 0.0
  %1354 = vmatprep.subr.mxu0 0.0
  %1355 = vmatpush2.msra.mxu0 0.0
  %1356 = vmatprep.subr.mxu0 0.0
  %1357 = vmatpush2.msra.mxu0 0.0
  %1358 = vmatprep.subr.mxu0 0.0
  %1359 = vmatpush2.msra.mxu0 0.0
  %1360 = vmatprep.subr.mxu0 0.0
  %1361 = vmatpush2.msra.mxu0 0.0
  %1362 = vmatprep.subr.mxu0 0.0
  %1363 = vmatpush2.msra.mxu0 0.0
  %1364 = vmatprep.subr.mxu0 0.0
  %1365 = vmatpush2.msra.mxu0 0.0
  %1366 = vmatprep.subr.mxu0 0.0
  %1367 = vmatpush2.msra.mxu0 0.0
  %1368 = vmatprep.subr.mxu0 0.0
  %1369 = vmatpush2.msra.mxu0 0.0
  %1370 = vmatprep.subr.mxu0 0.0
  %1371 = vmatpush2.msra.mxu0 0.0
  %1372 = vmatprep.mubr.f32.mxu0 0.0
  %1373 = vmatmul.mubr.f32.gmra.mxu0 %v1291
  %v1374 = vpop.f32.mrf.mxu0
  %v1375 = vpop.f32.mrf.mxu0
  %1376 = vmatprep.mubr.f32.mxu0 0.0
  %1377 = vmatmul.mubr.f32.gmra.mxu0 %v1294
  %v1378 = vpop.f32.mrf.mxu0
  %v1379 = vpop.f32.mrf.mxu0
  %1380 = vmatprep.mubr.f32.mxu0 0.0
  %1381 = vmatmul.mubr.f32.gmra.mxu0 %v1297
  %v1382 = vpop.f32.mrf.mxu0
  %v1383 = vadd.f32 %v1288, %v1382
  %v1384 = vpop.f32.mrf.mxu0
  %1385 = vmatprep.mubr.f32.mxu0 0.0
  %1386 = vmatmul.mubr.f32.gmra.mxu0 %v1300
  %v1387 = vpop.f32.mrf.mxu0
  %v1388 = vpop.f32.mrf.mxu0
  %1389 = vmatprep.mubr.f32.mxu0 0.0
  %1390 = vmatmul.mubr.f32.gmra.mxu0 %v1303
  %v1391 = vpop.f32.mrf.mxu0
  %v1392 = vpop.f32.mrf.mxu0
  %1393 = vmatprep.mubr.f32.mxu0 0.0
  %1394 = vmatmul.mubr.f32.gmra.mxu0 %v1306
  %v1395 = vpop.f32.mrf.mxu0
  %v1396 = vadd.f32 %v1288, %v1395
  %v1397 = vpop.f32.mrf.mxu0
  %1398 = vdwg.mxu0
  %v1399 = vadd.f32 %v1144, %v1383
  %v1400 = vadd.f32 %v1147, %v1396
  %v1401 = vld [vmem:[%s6 + $0x6] sm:$0x1]
  %v1402 = vld [vmem:[%s6 + $0x7] sm:$0x1]
  %v1403 = vsel %vm322, %v1399, 0.0
  %1404 = vadd.xlane.f32.xlu0 %v1403
  %v1405 = vpop.xlane.xlu0 %1404
  %v1406 = vsel %vm322, %v1400, 0.0
  %1407 = vadd.xlane.f32.xlu0 %v1406
  %v1408 = vpop.xlane.xlu0 %1407
  %v1409 = vmul.f32 %v1405, %v1067
  %v1410 = vmul.f32 %v1408, %v1067
  %v1411 = vsub.f32 %v1399, %v1409
  %v1412 = vsub.f32 %v1400, %v1410
  %v1413 = vmul.f32 %v1411, %v1411
  %v1414 = vmul.f32 %v1412, %v1412
  %v1415 = vsel %vm322, %v1413, 0.0
  %1416 = vadd.xlane.f32.xlu0 %v1415
  %v1417 = vpop.xlane.xlu0 %1416
  %v1418 = vsel %vm322, %v1414, 0.0
  %1419 = vadd.xlane.f32.xlu0 %v1418
  %v1420 = vpop.xlane.xlu0 %1419
  %v1421 = vmul.f32 %v1417, %v1067
  %v1422 = vmul.f32 %v1420, %v1067
  %v1423 = vadd.f32 %v1421, 1e-05
  %v1424 = vadd.f32 %v1422, 1e-05
  %v1425 = vrsqrt.pop %v1423
  %v1426 = vrsqrt.pop %v1424
  %v1427 = vmul.f32 %v1411, %v1425
  %v1428 = vmul.f32 %v1412, %v1426
  %v1429 = vlaneseq
  %v1430 = vshrl.u32 %v1429, 7
  %v1431 = vsub.s32 0, %v1430
  %v1432 = vrot.slane %v1401, %v1431
  %v1433 = vmul.f32 %v1427, %v1432
  %v1434 = vmul.f32 %v1428, %v1432
  %v1435 = vlaneseq
  %v1436 = vshrl.u32 %v1435, 7
  %v1437 = vsub.s32 0, %v1436
  %v1438 = vrot.slane %v1402, %v1437
  %v1439 = vadd.f32 %v1433, %v1438
  %v1440 = vadd.f32 %v1434, %v1438
  %vm1441 = vcmp.lt.s32.totalorder %v37, 42
  %vm1442 = vcmp.lt.s32.totalorder %v40, 42
  %v1443 = vsel %vm1441, 1, 0
  %v1444 = vsel %vm1442, 1, 0
  %v1445 = vcvt.s32.f32 %v1443
  %v1446 = vcvt.s32.f32 %v1444
  %v1447 = vld [vmem:[%s7] sm:$0xff]
  %v1448 = vld [vmem:[%s7 + $0x8] sm:$0xff]
  %v1449 = vld [vmem:[%s7 + $0x10] sm:$0xff]
  %v1450 = vld [vmem:[%s7 + $0x18] sm:$0xff]
  %v1451 = vld [vmem:[%s7 + $0x20] sm:$0xff]
  %v1452 = vld [vmem:[%s7 + $0x28] sm:$0xff]
  %v1453 = vld [vmem:[%s7 + $0x30] sm:$0xff]
  %v1454 = vld [vmem:[%s7 + $0x38] sm:$0xff]
  %v1455 = vld [vmem:[%s7 + $0x40] sm:$0xff]
  %v1456 = vld [vmem:[%s7 + $0x48] sm:$0xff]
  %v1457 = vld [vmem:[%s7 + $0x50] sm:$0xff]
  %v1458 = vld [vmem:[%s7 + $0x58] sm:$0xff]
  %v1459 = vld [vmem:[%s9] ss:$2 sm:$0x7]
  %v1461 = vlaneseq
  %v1462 = vshrl.u32 %v1461, 7
  %v1463 = vsub.s32 0, %v1462
  %v1464 = vrot.slane %v1459, %v1463
  %v1465 = vlaneseq
  %v1466 = vshrl.u32 %v1465, 7
  %v1467 = vsub.s32 1, %v1466
  %v1468 = vrot.slane %v1459, %v1467
  %v1469 = vlaneseq
  %v1470 = vshrl.u32 %v1469, 7
  %v1471 = vsub.s32 2, %v1470
  %v1472 = vrot.slane %v1459, %v1471
  %v1477 = vsel %vm322, %v1439, 0
  %v1480 = vsel %vm322, %v1440, 0
  %1482 = vmatprep.subr.mxu0 0.0
  %1483 = vmatpush1.msra.mxu0 0.0
  %1484 = vmatprep.subr.mxu0 0.0
  %1485 = vmatpush1.msra.mxu0 0.0
  %1486 = vmatprep.subr.mxu0 0.0
  %1487 = vmatpush1.msra.mxu0 0.0
  %1488 = vmatprep.subr.mxu0 0.0
  %1489 = vmatpush1.msra.mxu0 0.0
  %1490 = vmatprep.subr.mxu0 0.0
  %1491 = vmatpush1.msra.mxu0 0.0
  %1492 = vmatprep.subr.mxu0 0.0
  %1493 = vmatpush1.msra.mxu0 0.0
  %1494 = vmatprep.subr.mxu0 0.0
  %1495 = vmatpush1.msra.mxu0 0.0
  %1496 = vmatprep.subr.mxu0 0.0
  %1497 = vmatpush1.msra.mxu0 0.0
  %1498 = vmatprep.subr.mxu0 0.0
  %1499 = vmatpush1.msra.mxu0 0.0
  %1500 = vmatprep.subr.mxu0 0.0
  %1501 = vmatpush1.msra.mxu0 0.0
  %1502 = vmatprep.subr.mxu0 0.0
  %1503 = vmatpush1.msra.mxu0 0.0
  %1504 = vmatprep.subr.mxu0 0.0
  %1505 = vmatpush1.msra.mxu0 0.0
  %1506 = vmatprep.subr.mxu0 %v1457
  %1507 = vmatpush1.msra.mxu0 %v1456
  %1508 = vmatprep.subr.mxu0 %v1454
  %1509 = vmatpush1.msra.mxu0 %v1453
  %1510 = vmatprep.subr.mxu0 %v1451
  %1511 = vmatpush1.msra.mxu0 %v1450
  %1512 = vmatprep.subr.mxu0 %v1448
  %1513 = vmatpush1.msra.mxu0 %v1447
  %1514 = vmatprep.subr.mxu0 0.0
  %1515 = vmatpush2.msra.mxu0 0.0
  %1516 = vmatprep.subr.mxu0 0.0
  %1517 = vmatpush2.msra.mxu0 0.0
  %1518 = vmatprep.subr.mxu0 0.0
  %1519 = vmatpush2.msra.mxu0 0.0
  %1520 = vmatprep.subr.mxu0 0.0
  %1521 = vmatpush2.msra.mxu0 0.0
  %1522 = vmatprep.subr.mxu0 0.0
  %1523 = vmatpush2.msra.mxu0 0.0
  %1524 = vmatprep.subr.mxu0 0.0
  %1525 = vmatpush2.msra.mxu0 0.0
  %1526 = vmatprep.subr.mxu0 0.0
  %1527 = vmatpush2.msra.mxu0 0.0
  %1528 = vmatprep.subr.mxu0 0.0
  %1529 = vmatpush2.msra.mxu0 0.0
  %1530 = vmatprep.subr.mxu0 0.0
  %1531 = vmatpush2.msra.mxu0 0.0
  %1532 = vmatprep.subr.mxu0 0.0
  %1533 = vmatpush2.msra.mxu0 0.0
  %1534 = vmatprep.subr.mxu0 0.0
  %1535 = vmatpush2.msra.mxu0 0.0
  %1536 = vmatprep.subr.mxu0 0.0
  %1537 = vmatpush2.msra.mxu0 0.0
  %1538 = vmatprep.subr.mxu0 0.0
  %1539 = vmatpush2.msra.mxu0 0.0
  %1540 = vmatprep.subr.mxu0 0.0
  %1541 = vmatpush2.msra.mxu0 0.0
  %1542 = vmatprep.subr.mxu0 0.0
  %1543 = vmatpush2.msra.mxu0 0.0
  %1544 = vmatprep.subr.mxu0 0.0
  %1545 = vmatpush2.msra.mxu0 0.0
  %1546 = vmatprep.mubr.f32.mxu0 0.0
  %1547 = vmatmul.mubr.f32.gmra.mxu0 %v1477
  %v1548 = vpop.f32.mrf.mxu0
  %v1549 = vadd.f32 %v1464, %v1548
  %v1550 = vpop.f32.mrf.mxu0
  %v1551 = vadd.f32 %v1468, %v1550
  %1552 = vmatprep.mubr.f32.mxu0 0.0
  %1553 = vmatmul.mubr.f32.gmra.mxu0 %v1480
  %v1554 = vpop.f32.mrf.mxu0
  %v1555 = vadd.f32 %v1464, %v1554
  %v1556 = vpop.f32.mrf.mxu0
  %v1557 = vadd.f32 %v1468, %v1556
  %1558 = vdwg.mxu0
  %1559 = vmatprep.subr.mxu0 0.0
  %1560 = vmatpush1.msra.mxu0 0.0
  %1561 = vmatprep.subr.mxu0 0.0
  %1562 = vmatpush1.msra.mxu0 0.0
  %1563 = vmatprep.subr.mxu0 0.0
  %1564 = vmatpush1.msra.mxu0 0.0
  %1565 = vmatprep.subr.mxu0 0.0
  %1566 = vmatpush1.msra.mxu0 0.0
  %1567 = vmatprep.subr.mxu0 0.0
  %1568 = vmatpush1.msra.mxu0 0.0
  %1569 = vmatprep.subr.mxu0 0.0
  %1570 = vmatpush1.msra.mxu0 0.0
  %1571 = vmatprep.subr.mxu0 0.0
  %1572 = vmatpush1.msra.mxu0 0.0
  %1573 = vmatprep.subr.mxu0 0.0
  %1574 = vmatpush1.msra.mxu0 0.0
  %1575 = vmatprep.subr.mxu0 0.0
  %1576 = vmatpush1.msra.mxu0 0.0
  %1577 = vmatprep.subr.mxu0 0.0
  %1578 = vmatpush1.msra.mxu0 0.0
  %1579 = vmatprep.subr.mxu0 0.0
  %1580 = vmatpush1.msra.mxu0 0.0
  %1581 = vmatprep.subr.mxu0 0.0
  %1582 = vmatpush1.msra.mxu0 0.0
  %1583 = vmatprep.subr.mxu0 0.0
  %1584 = vmatpush1.msra.mxu0 %v1458
  %1585 = vmatprep.subr.mxu0 0.0
  %1586 = vmatpush1.msra.mxu0 %v1455
  %1587 = vmatprep.subr.mxu0 0.0
  %1588 = vmatpush1.msra.mxu0 %v1452
  %1589 = vmatprep.subr.mxu0 0.0
  %1590 = vmatpush1.msra.mxu0 %v1449
  %1591 = vmatprep.subr.mxu0 0.0
  %1592 = vmatpush2.msra.mxu0 0.0
  %1593 = vmatprep.subr.mxu0 0.0
  %1594 = vmatpush2.msra.mxu0 0.0
  %1595 = vmatprep.subr.mxu0 0.0
  %1596 = vmatpush2.msra.mxu0 0.0
  %1597 = vmatprep.subr.mxu0 0.0
  %1598 = vmatpush2.msra.mxu0 0.0
  %1599 = vmatprep.subr.mxu0 0.0
  %1600 = vmatpush2.msra.mxu0 0.0
  %1601 = vmatprep.subr.mxu0 0.0
  %1602 = vmatpush2.msra.mxu0 0.0
  %1603 = vmatprep.subr.mxu0 0.0
  %1604 = vmatpush2.msra.mxu0 0.0
  %1605 = vmatprep.subr.mxu0 0.0
  %1606 = vmatpush2.msra.mxu0 0.0
  %1607 = vmatprep.subr.mxu0 0.0
  %1608 = vmatpush2.msra.mxu0 0.0
  %1609 = vmatprep.subr.mxu0 0.0
  %1610 = vmatpush2.msra.mxu0 0.0
  %1611 = vmatprep.subr.mxu0 0.0
  %1612 = vmatpush2.msra.mxu0 0.0
  %1613 = vmatprep.subr.mxu0 0.0
  %1614 = vmatpush2.msra.mxu0 0.0
  %1615 = vmatprep.subr.mxu0 0.0
  %1616 = vmatpush2.msra.mxu0 0.0
  %1617 = vmatprep.subr.mxu0 0.0
  %1618 = vmatpush2.msra.mxu0 0.0
  %1619 = vmatprep.subr.mxu0 0.0
  %1620 = vmatpush2.msra.mxu0 0.0
  %1621 = vmatprep.subr.mxu0 0.0
  %1622 = vmatpush2.msra.mxu0 0.0
  %1623 = vmatprep.mubr.f32.mxu0 0.0
  %1624 = vmatmul.mubr.f32.gmra.mxu0 %v1477
  %v1625 = vpop.f32.mrf.mxu0
  %v1626 = vadd.f32 %v1472, %v1625
  %v1627 = vpop.f32.mrf.mxu0
  %1628 = vmatprep.mubr.f32.mxu0 0.0
  %1629 = vmatmul.mubr.f32.gmra.mxu0 %v1480
  %v1630 = vpop.f32.mrf.mxu0
  %v1631 = vadd.f32 %v1472, %v1630
  %v1632 = vpop.f32.mrf.mxu0
  %1633 = vdwg.mxu0
  %v1634 = vmax.f32 %v1549, 0.0
  %v1635 = vmax.f32 %v1551, 0.0
  %v1636 = vmax.f32 %v1626, 0.0
  %v1637 = vmax.f32 %v1555, 0.0
  %v1638 = vmax.f32 %v1557, 0.0
  %v1639 = vmax.f32 %v1631, 0.0
  %v1640 = vld [vmem:[%s8] sm:$0xff]
  %v1641 = vld [vmem:[%s8 + $0x8] sm:$0xff]
  %v1642 = vld [vmem:[%s8 + $0x10] sm:$0xff]
  %v1643 = vld [vmem:[%s8 + $0x18] sm:$0xff]
  %v1644 = vld [vmem:[%s8 + $0x20] sm:$0xff]
  %v1645 = vld [vmem:[%s8 + $0x28] sm:$0xff]
  %v1646 = vld [vmem:[%s8 + $0x30] sm:$0xff]
  %v1647 = vld [vmem:[%s8 + $0x38] sm:$0xff]
  %v1648 = vld [vmem:[%s8 + $0x40] sm:$0xff]
  %v1649 = vld [vmem:[%s8 + $0x48] sm:$0xff]
  %v1650 = vld [vmem:[%s8 + $0x50] sm:$0xff]
  %v1651 = vld [vmem:[%s8 + $0x58] sm:$0xff]
  %v1652 = vld [vmem:[%s8 + $0x60] sm:$0xff]
  %v1653 = vld [vmem:[%s8 + $0x68] sm:$0xff]
  %v1654 = vld [vmem:[%s8 + $0x70] sm:$0xff]
  %v1655 = vld [vmem:[%s8 + $0x78] sm:$0xff]
  %v1656 = vld [vmem:[%s8 + $0x80] sm:$0xff]
  %v1657 = vld [vmem:[%s8 + $0x88] sm:$0xff]
  %v1658 = vld [vmem:[%s8 + $0x90] sm:$0xff]
  %v1659 = vld [vmem:[%s8 + $0x98] sm:$0xff]
  %v1660 = vld [vmem:[%s8 + $0xa0] sm:$0xff]
  %v1661 = vld [vmem:[%s8 + $0xa8] sm:$0xff]
  %v1662 = vld [vmem:[%s8 + $0xb0] sm:$0xff]
  %v1663 = vld [vmem:[%s8 + $0xb8] sm:$0xff]
  %v1664 = vld [vmem:[%s8 + $0xc0] sm:$0xff]
  %v1665 = vld [vmem:[%s8 + $0xc8] sm:$0xff]
  %v1666 = vld [vmem:[%s8 + $0xd0] sm:$0xff]
  %v1667 = vld [vmem:[%s8 + $0xd8] sm:$0xff]
  %v1668 = vld [vmem:[%s8 + $0xe0] sm:$0xff]
  %v1669 = vld [vmem:[%s8 + $0xe8] sm:$0xff]
  %v1670 = vld [vmem:[%s8 + $0xf0] sm:$0xff]
  %v1671 = vld [vmem:[%s8 + $0xf8] sm:$0xff]
  %v1672 = vld [vmem:[%s8 + $0x100] sm:$0xff]
  %v1673 = vld [vmem:[%s8 + $0x108] sm:$0xff]
  %v1674 = vld [vmem:[%s8 + $0x110] sm:$0xff]
  %v1675 = vld [vmem:[%s8 + $0x118] sm:$0xff]
  %v1676 = vld [vmem:[%s8 + $0x120] sm:$0xff]
  %v1677 = vld [vmem:[%s8 + $0x128] sm:$0xff]
  %v1678 = vld [vmem:[%s8 + $0x130] sm:$0xff]
  %v1679 = vld [vmem:[%s8 + $0x138] sm:$0xff]
  %v1680 = vld [vmem:[%s9 + $0x1] sm:$0x1]
  %v1681 = vlaneseq
  %v1682 = vshrl.u32 %v1681, 7
  %v1683 = vsub.s32 0, %v1682
  %v1684 = vrot.slane %v1680, %v1683
  %v1686 = vsel %vm1289, %v1636, 0
  %v1689 = vsel %vm1289, %v1639, 0
  %1691 = vmatprep.subr.mxu0 0.0
  %1692 = vmatpush1.msra.mxu0 %v1655
  %1693 = vmatprep.subr.mxu0 0.0
  %1694 = vmatpush1.msra.mxu0 %v1654
  %1695 = vmatprep.subr.mxu0 0.0
  %1696 = vmatpush1.msra.mxu0 %v1653
  %1697 = vmatprep.subr.mxu0 0.0
  %1698 = vmatpush1.msra.mxu0 %v1652
  %1699 = vmatprep.subr.mxu0 0.0
  %1700 = vmatpush1.msra.mxu0 %v1651
  %1701 = vmatprep.subr.mxu0 0.0
  %1702 = vmatpush1.msra.mxu0 %v1650
  %1703 = vmatprep.subr.mxu0 0.0
  %1704 = vmatpush1.msra.mxu0 %v1649
  %1705 = vmatprep.subr.mxu0 0.0
  %1706 = vmatpush1.msra.mxu0 %v1648
  %1707 = vmatprep.subr.mxu0 0.0
  %1708 = vmatpush1.msra.mxu0 %v1647
  %1709 = vmatprep.subr.mxu0 0.0
  %1710 = vmatpush1.msra.mxu0 %v1646
  %1711 = vmatprep.subr.mxu0 0.0
  %1712 = vmatpush1.msra.mxu0 %v1645
  %1713 = vmatprep.subr.mxu0 0.0
  %1714 = vmatpush1.msra.mxu0 %v1644
  %1715 = vmatprep.subr.mxu0 0.0
  %1716 = vmatpush1.msra.mxu0 %v1643
  %1717 = vmatprep.subr.mxu0 0.0
  %1718 = vmatpush1.msra.mxu0 %v1642
  %1719 = vmatprep.subr.mxu0 0.0
  %1720 = vmatpush1.msra.mxu0 %v1641
  %1721 = vmatprep.subr.mxu0 0.0
  %1722 = vmatpush1.msra.mxu0 %v1640
  %1723 = vmatprep.subr.mxu0 0.0
  %1724 = vmatpush2.msra.mxu0 %v1671
  %1725 = vmatprep.subr.mxu0 0.0
  %1726 = vmatpush2.msra.mxu0 %v1670
  %1727 = vmatprep.subr.mxu0 0.0
  %1728 = vmatpush2.msra.mxu0 %v1669
  %1729 = vmatprep.subr.mxu0 0.0
  %1730 = vmatpush2.msra.mxu0 %v1668
  %1731 = vmatprep.subr.mxu0 0.0
  %1732 = vmatpush2.msra.mxu0 %v1667
  %1733 = vmatprep.subr.mxu0 0.0
  %1734 = vmatpush2.msra.mxu0 %v1666
  %1735 = vmatprep.subr.mxu0 0.0
  %1736 = vmatpush2.msra.mxu0 %v1665
  %1737 = vmatprep.subr.mxu0 0.0
  %1738 = vmatpush2.msra.mxu0 %v1664
  %1739 = vmatprep.subr.mxu0 0.0
  %1740 = vmatpush2.msra.mxu0 %v1663
  %1741 = vmatprep.subr.mxu0 0.0
  %1742 = vmatpush2.msra.mxu0 %v1662
  %1743 = vmatprep.subr.mxu0 0.0
  %1744 = vmatpush2.msra.mxu0 %v1661
  %1745 = vmatprep.subr.mxu0 0.0
  %1746 = vmatpush2.msra.mxu0 %v1660
  %1747 = vmatprep.subr.mxu0 0.0
  %1748 = vmatpush2.msra.mxu0 %v1659
  %1749 = vmatprep.subr.mxu0 0.0
  %1750 = vmatpush2.msra.mxu0 %v1658
  %1751 = vmatprep.subr.mxu0 0.0
  %1752 = vmatpush2.msra.mxu0 %v1657
  %1753 = vmatprep.subr.mxu0 0.0
  %1754 = vmatpush2.msra.mxu0 %v1656
  %1755 = vmatprep.mubr.f32.mxu0 %v1635
  %1756 = vmatmul.mubr.f32.gmra.mxu0 %v1634
  %v1757 = vpop.f32.mrf.mxu0
  %v1758 = vadd.f32 %v1684, %v1757
  %v1759 = vpop.f32.mrf.mxu0
  %1760 = vmatprep.mubr.f32.mxu0 %v1638
  %1761 = vmatmul.mubr.f32.gmra.mxu0 %v1637
  %v1762 = vpop.f32.mrf.mxu0
  %v1763 = vadd.f32 %v1684, %v1762
  %v1764 = vpop.f32.mrf.mxu0
  %1765 = vdwg.mxu0
  %1766 = vmatprep.subr.mxu0 0.0
  %1767 = vmatpush1.msra.mxu0 0.0
  %1768 = vmatprep.subr.mxu0 0.0
  %1769 = vmatpush1.msra.mxu0 0.0
  %1770 = vmatprep.subr.mxu0 0.0
  %1771 = vmatpush1.msra.mxu0 0.0
  %1772 = vmatprep.subr.mxu0 0.0
  %1773 = vmatpush1.msra.mxu0 0.0
  %1774 = vmatprep.subr.mxu0 0.0
  %1775 = vmatpush1.msra.mxu0 0.0
  %1776 = vmatprep.subr.mxu0 0.0
  %1777 = vmatpush1.msra.mxu0 0.0
  %1778 = vmatprep.subr.mxu0 0.0
  %1779 = vmatpush1.msra.mxu0 0.0
  %1780 = vmatprep.subr.mxu0 0.0
  %1781 = vmatpush1.msra.mxu0 0.0
  %1782 = vmatprep.subr.mxu0 0.0
  %1783 = vmatpush1.msra.mxu0 %v1679
  %1784 = vmatprep.subr.mxu0 0.0
  %1785 = vmatpush1.msra.mxu0 %v1678
  %1786 = vmatprep.subr.mxu0 0.0
  %1787 = vmatpush1.msra.mxu0 %v1677
  %1788 = vmatprep.subr.mxu0 0.0
  %1789 = vmatpush1.msra.mxu0 %v1676
  %1790 = vmatprep.subr.mxu0 0.0
  %1791 = vmatpush1.msra.mxu0 %v1675
  %1792 = vmatprep.subr.mxu0 0.0
  %1793 = vmatpush1.msra.mxu0 %v1674
  %1794 = vmatprep.subr.mxu0 0.0
  %1795 = vmatpush1.msra.mxu0 %v1673
  %1796 = vmatprep.subr.mxu0 0.0
  %1797 = vmatpush1.msra.mxu0 %v1672
  %1798 = vmatprep.subr.mxu0 0.0
  %1799 = vmatpush2.msra.mxu0 0.0
  %1800 = vmatprep.subr.mxu0 0.0
  %1801 = vmatpush2.msra.mxu0 0.0
  %1802 = vmatprep.subr.mxu0 0.0
  %1803 = vmatpush2.msra.mxu0 0.0
  %1804 = vmatprep.subr.mxu0 0.0
  %1805 = vmatpush2.msra.mxu0 0.0
  %1806 = vmatprep.subr.mxu0 0.0
  %1807 = vmatpush2.msra.mxu0 0.0
  %1808 = vmatprep.subr.mxu0 0.0
  %1809 = vmatpush2.msra.mxu0 0.0
  %1810 = vmatprep.subr.mxu0 0.0
  %1811 = vmatpush2.msra.mxu0 0.0
  %1812 = vmatprep.subr.mxu0 0.0
  %1813 = vmatpush2.msra.mxu0 0.0
  %1814 = vmatprep.subr.mxu0 0.0
  %1815 = vmatpush2.msra.mxu0 0.0
  %1816 = vmatprep.subr.mxu0 0.0
  %1817 = vmatpush2.msra.mxu0 0.0
  %1818 = vmatprep.subr.mxu0 0.0
  %1819 = vmatpush2.msra.mxu0 0.0
  %1820 = vmatprep.subr.mxu0 0.0
  %1821 = vmatpush2.msra.mxu0 0.0
  %1822 = vmatprep.subr.mxu0 0.0
  %1823 = vmatpush2.msra.mxu0 0.0
  %1824 = vmatprep.subr.mxu0 0.0
  %1825 = vmatpush2.msra.mxu0 0.0
  %1826 = vmatprep.subr.mxu0 0.0
  %1827 = vmatpush2.msra.mxu0 0.0
  %1828 = vmatprep.subr.mxu0 0.0
  %1829 = vmatpush2.msra.mxu0 0.0
  %1830 = vmatprep.mubr.f32.mxu0 0.0
  %1831 = vmatmul.mubr.f32.gmra.mxu0 %v1686
  %v1832 = vpop.f32.mrf.mxu0
  %v1833 = vadd.f32 %v1758, %v1832
  %v1834 = vpop.f32.mrf.mxu0
  %1835 = vmatprep.mubr.f32.mxu0 0.0
  %1836 = vmatmul.mubr.f32.gmra.mxu0 %v1689
  %v1837 = vpop.f32.mrf.mxu0
  %v1838 = vadd.f32 %v1763, %v1837
  %v1839 = vpop.f32.mrf.mxu0
  %1840 = vdwg.mxu0
  %v1841 = vmul.f32 %v1833, %v1445
  %v1842 = vmul.f32 %v1838, %v1446
  %vm1843 = vcmask 7168
  %v1844 = vsel %vm1843, %v1841, 0.0
  %v1845 = vrot.slane %v1844, 4
  %v1846 = vadd.f32 %v1844, %v1845
  %v1847 = vrot.slane %v1846, 2
  %v1848 = vadd.f32 %v1846, %v1847
  %v1849 = vrot.slane %v1848, 1
  %v1850 = vadd.f32 %v1848, %v1849
  %v1851 = vsel %vm1843, %v1842, 0.0
  %v1852 = vrot.slane %v1851, 4
  %v1853 = vadd.f32 %v1851, %v1852
  %v1854 = vrot.slane %v1853, 2
  %v1855 = vadd.f32 %v1853, %v1854
  %v1856 = vrot.slane %v1855, 1
  %v1857 = vadd.f32 %v1855, %v1856
  %v1858 = vsel %vm1843, %v1445, 0.0
  %v1859 = vrot.slane %v1858, 4
  %v1860 = vadd.f32 %v1858, %v1859
  %v1861 = vrot.slane %v1860, 2
  %v1862 = vadd.f32 %v1860, %v1861
  %v1863 = vrot.slane %v1862, 1
  %v1864 = vadd.f32 %v1862, %v1863
  %v1865 = vsel %vm1843, %v1446, 0.0
  %v1866 = vrot.slane %v1865, 4
  %v1867 = vadd.f32 %v1865, %v1866
  %v1868 = vrot.slane %v1867, 2
  %v1869 = vadd.f32 %v1867, %v1868
  %v1870 = vrot.slane %v1869, 1
  %v1871 = vadd.f32 %v1869, %v1870
  %v1872 = vmax.f32 %v1864, 1.0
  %v1873 = vmax.f32 %v1871, 1.0
  %v1874 = vrcp.pop %v1872
  %v1875 = vrcp.pop %v1873
  %v1876 = vmul.f32 %v1850, %v1874
  %v1877 = vmul.f32 %v1857, %v1875
  %1879 = vset.pattern.permute.xlu0 0
  %1880 = vperm.xlu0 %1879, %v1876
  %v1881 = vpop.permute.xlu0 %1880
  %1884 = vset.pattern.permute.xlu0 0
  %1885 = vperm.xlu0 %1884, %v1877
  %v1886 = vpop.permute.xlu0 %1885
  %v1888 = vadd.f32 %v1881, %v1833
  %v1889 = vadd.f32 %v1886, %v1838
  %vm1890 = vcmp.gt.f32.partialorder %v1445, 0.5
  %vm1891 = vcmp.gt.f32.partialorder %v1446, 0.5
  %v1892 = vsel %vm1890, 1, 0
  %v1893 = vsel %vm1891, 1, 0
  %1894 = vset.pattern.permute.xlu0 0
  %1895 = vperm.xlu0 %1894, %v1892
  %v1896 = vpop.permute.xlu0 %1895
  %1897 = vset.pattern.permute.xlu0 0
  %1898 = vperm.xlu0 %1897, %v1893
  %v1899 = vpop.permute.xlu0 %1898
  %vm1900 = vcmp.eq.s32.totalorder %v1896, 1
  %vm1901 = vcmp.eq.s32.totalorder %v1899, 1
  %v1902 = vsel %vm1900, %v1888, -inf
  %v1903 = vsel %vm1901, %v1889, -inf
  %1906 = vrot.lane.b32.xlu0 %v1902, 127
  %v1907 = vpop.permute.xlu0 %1906
  %1908 = vrot.lane.b32.xlu0 %v1903, 127
  %v1909 = vpop.permute.xlu0 %1908
  %vm1912 = vcmask 31744
  %1913 = vst.msk [vmem:[%s10] sm:$0xff] %vm1912, %v1907
  %1914 = vst.msk [vmem:[%s10 + $0x8] sm:$0xff] %vm1912, %v1909
  // Predicated region
  $region42: #{theta_model_forward.1} parent=0 // pred_check
    _
  $region43: #{theta_model_forward.1} parent=0 // pred_check_branch
    %1916 = sbr.rel (0) target = $region45
  $region44: #{theta_model_forward.1} parent=0 // pred_region
    _
  $region45: #{theta_model_forward.1} parent=0 // pred_fallthru
    _
  // Predicated region
  $region46: #{theta_model_forward.1} parent=0 // pred_check
    _
  $region47: #{theta_model_forward.1} parent=0 // pred_check_branch
    %1918 = sbr.rel (0) target = $region49
  $region48: #{theta_model_forward.1} parent=0 // pred_region
    _
  $region49: #{theta_model_forward.1} parent=0 // pred_fallthru
    _

</llo_original>
